<compile_context>
chip_gen: v6e
topology: v6e:2x2x1
jax: 0.10.0
libtpu: 0.0.40
codegen_flags: <defaults>
</compile_context>

<pallas_src>
import jax
import jax.numpy as jnp
from jax.experimental import pallas as pl
from jax.experimental.pallas import tpu as pltpu


def _round_up(x, m):
    return (x + m - 1) // m * m


def _vmem_capacity_bytes():
    try:
        return int(pltpu.get_tpu_info().vmem_capacity_bytes)
    except Exception:
        return 64 * 1024 * 1024  # conservative fallback (v7x per-core physical VMEM)


def _make_kernel(W, C_in, C_out):
    CC = 2 * C_out  # columns per (kh, w) pair, ordered (kw, oc)

    def kernel(x_ref, w_ref, b_ref, o_ref):
        # x_ref: (rows_t, W*C_in)      streamed tile (one matrix row per input image row)
        # w_ref: (C_in, 4*C_out)       resident weights, columns ordered (kh, kw, oc)
        # b_ref: (1, 4*C_out)          resident f32 bias, tiled over the 4 taps
        # o_ref: (rows_t, 4*W*C_out)   flat NHWC rows: col = (kh*W + w)*CC + kw*C_out + oc
        wmat = w_ref[...]
        bvec = b_ref[...]
        for w in range(W):  # static unroll; all slice offsets are compile-time constants
            xw = x_ref[:, w * C_in:(w + 1) * C_in]                      # (rows_t, C_in)
            acc = jnp.dot(xw, wmat, preferred_element_type=jnp.float32) + bvec
            res = acc.astype(o_ref.dtype)                               # (rows_t, 4*C_out)
            o_ref[:, w * CC:(w + 1) * CC] = res[:, :CC]                 # kh = 0 taps
            o_ref[:, (W + w) * CC:(W + w + 1) * CC] = res[:, CC:]       # kh = 1 taps

    return kernel


def _pick_rows_per_tile(R, W, C_in, C_out, itemsize, budget_bytes):
    """Rows (of N*H) per tile: largest that fits the VMEM budget, (8,128)-friendly,
    and small enough that the grid has >= 2 steps (v7x megacore)."""
    lane_x = _round_up(W * C_in, 128)
    lane_o = _round_up(4 * W * C_out, 128)
    lane_w = _round_up(4 * C_out, 128)
    # double-buffered resident weights + bias
    resident = 2 * (_round_up(C_in, 8) * lane_w + 8 * lane_w) * itemsize
    # double-buffered x/out tiles + f32 acc / cast temporaries per row
    per_row = 2 * (lane_x + lane_o) * itemsize + 3 * lane_w * 4
    avail = max(budget_bytes - resident, 8 * per_row)
    rows = max(8, int(avail // per_row))

    if R <= 8:
        return R                       # single block; block dims == full dims (always legal)
    rows = min(rows, R)
    if R >= 16:                        # ensure >= 2 grid steps so megacore sharding engages
        rows = min(rows, _round_up(pl.cdiv(R, 2), 8))
    rows = max(8, (rows // 8) * 8)     # block second-minor dim must be a multiple of 8
    return R if rows >= R else rows


def up_sample_forward(x_nchw, weight, bias, *, rows_per_tile=None):
    """ConvTranspose2d(C_in -> C_out, k=2, s=2) forward.

    x_nchw: (N, C_in, H, W)
    weight: (C_in, C_out, 2, 2)   (PyTorch ConvTranspose2d layout)
    bias:   (C_out,)
    returns (N, C_out, 2H, 2W)
    """
    N, C_in, H, W = x_nchw.shape
    c_in_w, C_out, kh_, kw_ = weight.shape
    assert (c_in_w, kh_, kw_) == (C_in, 2, 2), "unexpected weight shape"
    dtype = x_nchw.dtype
    itemsize = jnp.dtype(dtype).itemsize
    R = N * H

    cap = _vmem_capacity_bytes()
    budget = max(16 * 1024 * 1024, int(cap * 0.45))        # ~58 MiB on v5e/v6e, ~29 MiB on v7x
    vmem_limit = min(int(cap * 0.75), 112 * 1024 * 1024)

    if rows_per_tile is None:
        rows_t = _pick_rows_per_tile(R, W, C_in, C_out, itemsize, budget)
    else:
        rows_t = min(int(rows_per_tile), R)
        if rows_t < R:
            rows_t = max(8, (rows_t // 8) * 8)

    grid = (pl.cdiv(R, rows_t),)       # ragged last block handled by Pallas masking

    # Inherent boundary transpose #1: NCHW -> NHWC, flattened to one matrix row per
    # input image row (R = N*H rows, each W*C_in wide, lane-dense).
    x_2d = jnp.transpose(x_nchw, (0, 2, 3, 1)).reshape(R, W * C_in)

    # (C_in, C_out, 2, 2) -> (C_in, 4*C_out), columns ordered (kh, kw, oc).
    w_flat = jnp.transpose(weight, (0, 2, 3, 1)).reshape(C_in, 4 * C_out).astype(dtype)
    b_flat = jnp.tile(bias.astype(jnp.float32), 4).reshape(1, 4 * C_out)

    out2 = pl.pallas_call(
        _make_kernel(W, C_in, C_out),
        out_shape=jax.ShapeDtypeStruct((R, 4 * W * C_out), dtype),
        grid=grid,
        in_specs=[
            pl.BlockSpec((rows_t, W * C_in), lambda i: (i, 0)),   # streamed, double-buffered
            pl.BlockSpec((C_in, 4 * C_out), lambda i: (0, 0)),    # resident weights
            pl.BlockSpec((1, 4 * C_out), lambda i: (0, 0)),       # resident bias
        ],
        out_specs=pl.BlockSpec((rows_t, 4 * W * C_out), lambda i: (i, 0)),
        compiler_params=pltpu.CompilerParams(
            dimension_semantics=("parallel",),                    # megacore sharding on v7x
            vmem_limit_bytes=vmem_limit),
    )(x_2d, w_flat, b_flat)

    # out2's flat layout is exactly NHWC (the 2x2 scatter was fused into the stores):
    # row r = n*H + h holds output rows (2h, 2h+1); reshape is a pure metadata view.
    y_nhwc = out2.reshape(N, 2 * H, 2 * W, C_out)
    # Inherent boundary transpose #2: NHWC -> NCHW (single pass).
    return jnp.transpose(y_nhwc, (0, 3, 1, 2))


def _reference(x_nchw, weight, bias):
    # Pure-JAX reference for the stride==kernel ConvTranspose2d.
    y = jnp.einsum("nihw,iokl->nohkwl", x_nchw, weight)
    N, C_out, H, _, W, _ = y.shape
    y = y.reshape(N, C_out, 2 * H, 2 * W)
    return y + bias[None, :, None, None]


def _run_case(key, N, C_in, H, W, rows_per_tile=None):
    k_x, k_w, k_b = jax.random.split(key, 3)
    C_out = C_in // 2
    x = jax.random.normal(k_x, (N, C_in, H, W), dtype=jnp.float32)
    weight = jax.random.normal(k_w, (C_in, C_out, 2, 2), dtype=jnp.float32) * 0.1
    bias = jax.random.normal(k_b, (C_out,), dtype=jnp.float32) * 0.1

    out = jax.block_until_ready(
        up_sample_forward(x, weight, bias, rows_per_tile=rows_per_tile))
    ref = _reference(x, weight, bias)
    assert out.shape == (N, C_out, 2 * H, 2 * W), out.shape
    assert jnp.allclose(out, ref, atol=1e-5, rtol=1e-5), "mismatch vs reference"


if __name__ == "__main__":
    key = jax.random.PRNGKey(0)
    k0, k1, k2, k3 = jax.random.split(key, 4)

    # Auto tile selection (VMEM-budget path): R=32 -> 2 grid steps.
    _run_case(k0, N=2, C_in=4, H=16, W=16)
    # Forced small tile: 4 grid steps, exercises the streamed double-buffered pipeline.
    _run_case(k1, N=2, C_in=4, H=16, W=16, rows_per_tile=8)
    # Ragged channel/spatial sizes, single full block (block dims == full array dims).
    _run_case(k2, N=1, C_in=8, H=5, W=7)
    # Ragged grid: R=10 with 8-row tiles -> masked last block, no input padding.
    _run_case(k3, N=1, C_in=4, H=10, W=8, rows_per_tile=8)

    print("KERNEL_OK")
</pallas_src>

<mosaic_0001>
module attributes {stable_mosaic.version = 11 : i64} {
  func.func @kernel(%arg0: i32, %arg1: memref<16x64xf32, #tpu.memory_space<vmem>>, %arg2: memref<4x8xf32, #tpu.memory_space<vmem>>, %arg3: memref<1x8xf32, #tpu.memory_space<vmem>>, %arg4: memref<16x128xf32, #tpu.memory_space<vmem>>) attributes {dimension_semantics = [#tpu.dimension_semantics<parallel>], iteration_bounds = array<i64: 2>, scalar_prefetch = 0 : i64, scratch_operands = 0 : i64, tpu.core_type = #tpu.core_type<tc>, window_params = [{transform_indices = @transform_0, window_bounds = array<i64: 16, 64>}, {pipeline_mode = #tpu.pipeline_mode<synchronous>, transform_indices = @transform_1, window_bounds = array<i64: 4, 8>}, {pipeline_mode = #tpu.pipeline_mode<synchronous>, transform_indices = @transform_2, window_bounds = array<i64: 1, 8>}, {transform_indices = @transform_3, window_bounds = array<i64: 16, 128>}]} {
    %c0 = arith.constant 0 : index
    %c0_0 = arith.constant 0 : index
    %0 = vector.load %arg2[%c0, %c0_0] : memref<4x8xf32, #tpu.memory_space<vmem>>, vector<4x8xf32>
    %c0_1 = arith.constant 0 : index
    %c0_2 = arith.constant 0 : index
    %1 = vector.load %arg3[%c0_1, %c0_2] : memref<1x8xf32, #tpu.memory_space<vmem>>, vector<1x8xf32>
    %c0_3 = arith.constant 0 : index
    %c0_4 = arith.constant 0 : index
    %2 = vector.load %arg1[%c0_3, %c0_4] : memref<16x64xf32, #tpu.memory_space<vmem>>, vector<16x4xf32>
    %cst = arith.constant dense<0.000000e+00> : vector<16x8xf32>
    %3 = tpu.matmul %2, %0, %cst {dimension_numbers = #tpu.dot_dimension_numbers<[1], [0], [0], [1], [0, 0, 1, 1], [], []>} : vector<16x4xf32>, vector<4x8xf32>, vector<16x8xf32> -> vector<16x8xf32>
    %4 = vector.broadcast %1 : vector<1x8xf32> to vector<16x8xf32>
    %5 = arith.addf %3, %4 : vector<16x8xf32>
    %6 = vector.extract_strided_slice %5 {offsets = [0, 0], sizes = [16, 4], strides = [1, 1]} : vector<16x8xf32> to vector<16x4xf32>
    %c0_5 = arith.constant 0 : index
    %c0_6 = arith.constant 0 : index
    %7 = vector.load %arg4[%c0_5, %c0_6] : memref<16x128xf32, #tpu.memory_space<vmem>>, vector<16x4xf32>
    tpu.vector_store %arg4[%c0_5, %c0_6], %6 {strides = array<i32>} : memref<16x128xf32, #tpu.memory_space<vmem>>, vector<16x4xf32>,
    %8 = vector.extract_strided_slice %5 {offsets = [0, 4], sizes = [16, 4], strides = [1, 1]} : vector<16x8xf32> to vector<16x4xf32>
    %c0_7 = arith.constant 0 : index
    %c64 = arith.constant 64 : index
    %9 = vector.load %arg4[%c0_7, %c64] : memref<16x128xf32, #tpu.memory_space<vmem>>, vector<16x4xf32>
    tpu.vector_store %arg4[%c0_7, %c64], %8 {strides = array<i32>} : memref<16x128xf32, #tpu.memory_space<vmem>>, vector<16x4xf32>,
    %c0_8 = arith.constant 0 : index
    %c4 = arith.constant 4 : index
    %10 = vector.load %arg1[%c0_8, %c4] : memref<16x64xf32, #tpu.memory_space<vmem>>, vector<16x4xf32>
    %cst_9 = arith.constant dense<0.000000e+00> : vector<16x8xf32>
    %11 = tpu.matmul %10, %0, %cst_9 {dimension_numbers = #tpu.dot_dimension_numbers<[1], [0], [0], [1], [0, 0, 1, 1], [], []>} : vector<16x4xf32>, vector<4x8xf32>, vector<16x8xf32> -> vector<16x8xf32>
    %12 = vector.broadcast %1 : vector<1x8xf32> to vector<16x8xf32>
    %13 = arith.addf %11, %12 : vector<16x8xf32>
    %14 = vector.extract_strided_slice %13 {offsets = [0, 0], sizes = [16, 4], strides = [1, 1]} : vector<16x8xf32> to vector<16x4xf32>
    %c0_10 = arith.constant 0 : index
    %c4_11 = arith.constant 4 : index
    %15 = vector.load %arg4[%c0_10, %c4_11] : memref<16x128xf32, #tpu.memory_space<vmem>>, vector<16x4xf32>
    tpu.vector_store %arg4[%c0_10, %c4_11], %14 {strides = array<i32>} : memref<16x128xf32, #tpu.memory_space<vmem>>, vector<16x4xf32>,
    %16 = vector.extract_strided_slice %13 {offsets = [0, 4], sizes = [16, 4], strides = [1, 1]} : vector<16x8xf32> to vector<16x4xf32>
    %c0_12 = arith.constant 0 : index
    %c68 = arith.constant 68 : index
    %17 = vector.load %arg4[%c0_12, %c68] : memref<16x128xf32, #tpu.memory_space<vmem>>, vector<16x4xf32>
    tpu.vector_store %arg4[%c0_12, %c68], %16 {strides = array<i32>} : memref<16x128xf32, #tpu.memory_space<vmem>>, vector<16x4xf32>,
    %c0_13 = arith.constant 0 : index
    %c8 = arith.constant 8 : index
    %18 = vector.load %arg1[%c0_13, %c8] : memref<16x64xf32, #tpu.memory_space<vmem>>, vector<16x4xf32>
    %cst_14 = arith.constant dense<0.000000e+00> : vector<16x8xf32>
    %19 = tpu.matmul %18, %0, %cst_14 {dimension_numbers = #tpu.dot_dimension_numbers<[1], [0], [0], [1], [0, 0, 1, 1], [], []>} : vector<16x4xf32>, vector<4x8xf32>, vector<16x8xf32> -> vector<16x8xf32>
    %20 = vector.broadcast %1 : vector<1x8xf32> to vector<16x8xf32>
    %21 = arith.addf %19, %20 : vector<16x8xf32>
    %22 = vector.extract_strided_slice %21 {offsets = [0, 0], sizes = [16, 4], strides = [1, 1]} : vector<16x8xf32> to vector<16x4xf32>
    %c0_15 = arith.constant 0 : index
    %c8_16 = arith.constant 8 : index
    %23 = vector.load %arg4[%c0_15, %c8_16] : memref<16x128xf32, #tpu.memory_space<vmem>>, vector<16x4xf32>
    tpu.vector_store %arg4[%c0_15, %c8_16], %22 {strides = array<i32>} : memref<16x128xf32, #tpu.memory_space<vmem>>, vector<16x4xf32>,
    %24 = vector.extract_strided_slice %21 {offsets = [0, 4], sizes = [16, 4], strides = [1, 1]} : vector<16x8xf32> to vector<16x4xf32>
    %c0_17 = arith.constant 0 : index
    %c72 = arith.constant 72 : index
    %25 = vector.load %arg4[%c0_17, %c72] : memref<16x128xf32, #tpu.memory_space<vmem>>, vector<16x4xf32>
    tpu.vector_store %arg4[%c0_17, %c72], %24 {strides = array<i32>} : memref<16x128xf32, #tpu.memory_space<vmem>>, vector<16x4xf32>,
    %c0_18 = arith.constant 0 : index
    %c12 = arith.constant 12 : index
    %26 = vector.load %arg1[%c0_18, %c12] : memref<16x64xf32, #tpu.memory_space<vmem>>, vector<16x4xf32>
    %cst_19 = arith.constant dense<0.000000e+00> : vector<16x8xf32>
    %27 = tpu.matmul %26, %0, %cst_19 {dimension_numbers = #tpu.dot_dimension_numbers<[1], [0], [0], [1], [0, 0, 1, 1], [], []>} : vector<16x4xf32>, vector<4x8xf32>, vector<16x8xf32> -> vector<16x8xf32>
    %28 = vector.broadcast %1 : vector<1x8xf32> to vector<16x8xf32>
    %29 = arith.addf %27, %28 : vector<16x8xf32>
    %30 = vector.extract_strided_slice %29 {offsets = [0, 0], sizes = [16, 4], strides = [1, 1]} : vector<16x8xf32> to vector<16x4xf32>
    %c0_20 = arith.constant 0 : index
    %c12_21 = arith.constant 12 : index
    %31 = vector.load %arg4[%c0_20, %c12_21] : memref<16x128xf32, #tpu.memory_space<vmem>>, vector<16x4xf32>
    tpu.vector_store %arg4[%c0_20, %c12_21], %30 {strides = array<i32>} : memref<16x128xf32, #tpu.memory_space<vmem>>, vector<16x4xf32>,
    %32 = vector.extract_strided_slice %29 {offsets = [0, 4], sizes = [16, 4], strides = [1, 1]} : vector<16x8xf32> to vector<16x4xf32>
    %c0_22 = arith.constant 0 : index
    %c76 = arith.constant 76 : index
    %33 = vector.load %arg4[%c0_22, %c76] : memref<16x128xf32, #tpu.memory_space<vmem>>, vector<16x4xf32>
    tpu.vector_store %arg4[%c0_22, %c76], %32 {strides = array<i32>} : memref<16x128xf32, #tpu.memory_space<vmem>>, vector<16x4xf32>,
    %c0_23 = arith.constant 0 : index
    %c16 = arith.constant 16 : index
    %34 = vector.load %arg1[%c0_23, %c16] : memref<16x64xf32, #tpu.memory_space<vmem>>, vector<16x4xf32>
    %cst_24 = arith.constant dense<0.000000e+00> : vector<16x8xf32>
    %35 = tpu.matmul %34, %0, %cst_24 {dimension_numbers = #tpu.dot_dimension_numbers<[1], [0], [0], [1], [0, 0, 1, 1], [], []>} : vector<16x4xf32>, vector<4x8xf32>, vector<16x8xf32> -> vector<16x8xf32>
    %36 = vector.broadcast %1 : vector<1x8xf32> to vector<16x8xf32>
    %37 = arith.addf %35, %36 : vector<16x8xf32>
    %38 = vector.extract_strided_slice %37 {offsets = [0, 0], sizes = [16, 4], strides = [1, 1]} : vector<16x8xf32> to vector<16x4xf32>
    %c0_25 = arith.constant 0 : index
    %c16_26 = arith.constant 16 : index
    %39 = vector.load %arg4[%c0_25, %c16_26] : memref<16x128xf32, #tpu.memory_space<vmem>>, vector<16x4xf32>
    tpu.vector_store %arg4[%c0_25, %c16_26], %38 {strides = array<i32>} : memref<16x128xf32, #tpu.memory_space<vmem>>, vector<16x4xf32>,
    %40 = vector.extract_strided_slice %37 {offsets = [0, 4], sizes = [16, 4], strides = [1, 1]} : vector<16x8xf32> to vector<16x4xf32>
    %c0_27 = arith.constant 0 : index
    %c80 = arith.constant 80 : index
    %41 = vector.load %arg4[%c0_27, %c80] : memref<16x128xf32, #tpu.memory_space<vmem>>, vector<16x4xf32>
    tpu.vector_store %arg4[%c0_27, %c80], %40 {strides = array<i32>} : memref<16x128xf32, #tpu.memory_space<vmem>>, vector<16x4xf32>,
    %c0_28 = arith.constant 0 : index
    %c20 = arith.constant 20 : index
    %42 = vector.load %arg1[%c0_28, %c20] : memref<16x64xf32, #tpu.memory_space<vmem>>, vector<16x4xf32>
    %cst_29 = arith.constant dense<0.000000e+00> : vector<16x8xf32>
    %43 = tpu.matmul %42, %0, %cst_29 {dimension_numbers = #tpu.dot_dimension_numbers<[1], [0], [0], [1], [0, 0, 1, 1], [], []>} : vector<16x4xf32>, vector<4x8xf32>, vector<16x8xf32> -> vector<16x8xf32>
    %44 = vector.broadcast %1 : vector<1x8xf32> to vector<16x8xf32>
    %45 = arith.addf %43, %44 : vector<16x8xf32>
    %46 = vector.extract_strided_slice %45 {offsets = [0, 0], sizes = [16, 4], strides = [1, 1]} : vector<16x8xf32> to vector<16x4xf32>
    %c0_30 = arith.constant 0 : index
    %c20_31 = arith.constant 20 : index
    %47 = vector.load %arg4[%c0_30, %c20_31] : memref<16x128xf32, #tpu.memory_space<vmem>>, vector<16x4xf32>
    tpu.vector_store %arg4[%c0_30, %c20_31], %46 {strides = array<i32>} : memref<16x128xf32, #tpu.memory_space<vmem>>, vector<16x4xf32>,
    %48 = vector.extract_strided_slice %45 {offsets = [0, 4], sizes = [16, 4], strides = [1, 1]} : vector<16x8xf32> to vector<16x4xf32>
    %c0_32 = arith.constant 0 : index
    %c84 = arith.constant 84 : index
    %49 = vector.load %arg4[%c0_32, %c84] : memref<16x128xf32, #tpu.memory_space<vmem>>, vector<16x4xf32>
    tpu.vector_store %arg4[%c0_32, %c84], %48 {strides = array<i32>} : memref<16x128xf32, #tpu.memory_space<vmem>>, vector<16x4xf32>,
    %c0_33 = arith.constant 0 : index
    %c24 = arith.constant 24 : index
    %50 = vector.load %arg1[%c0_33, %c24] : memref<16x64xf32, #tpu.memory_space<vmem>>, vector<16x4xf32>
    %cst_34 = arith.constant dense<0.000000e+00> : vector<16x8xf32>
    %51 = tpu.matmul %50, %0, %cst_34 {dimension_numbers = #tpu.dot_dimension_numbers<[1], [0], [0], [1], [0, 0, 1, 1], [], []>} : vector<16x4xf32>, vector<4x8xf32>, vector<16x8xf32> -> vector<16x8xf32>
    %52 = vector.broadcast %1 : vector<1x8xf32> to vector<16x8xf32>
    %53 = arith.addf %51, %52 : vector<16x8xf32>
    %54 = vector.extract_strided_slice %53 {offsets = [0, 0], sizes = [16, 4], strides = [1, 1]} : vector<16x8xf32> to vector<16x4xf32>
    %c0_35 = arith.constant 0 : index
    %c24_36 = arith.constant 24 : index
    %55 = vector.load %arg4[%c0_35, %c24_36] : memref<16x128xf32, #tpu.memory_space<vmem>>, vector<16x4xf32>
    tpu.vector_store %arg4[%c0_35, %c24_36], %54 {strides = array<i32>} : memref<16x128xf32, #tpu.memory_space<vmem>>, vector<16x4xf32>,
    %56 = vector.extract_strided_slice %53 {offsets = [0, 4], sizes = [16, 4], strides = [1, 1]} : vector<16x8xf32> to vector<16x4xf32>
    %c0_37 = arith.constant 0 : index
    %c88 = arith.constant 88 : index
    %57 = vector.load %arg4[%c0_37, %c88] : memref<16x128xf32, #tpu.memory_space<vmem>>, vector<16x4xf32>
    tpu.vector_store %arg4[%c0_37, %c88], %56 {strides = array<i32>} : memref<16x128xf32, #tpu.memory_space<vmem>>, vector<16x4xf32>,
    %c0_38 = arith.constant 0 : index
    %c28 = arith.constant 28 : index
    %58 = vector.load %arg1[%c0_38, %c28] : memref<16x64xf32, #tpu.memory_space<vmem>>, vector<16x4xf32>
    %cst_39 = arith.constant dense<0.000000e+00> : vector<16x8xf32>
    %59 = tpu.matmul %58, %0, %cst_39 {dimension_numbers = #tpu.dot_dimension_numbers<[1], [0], [0], [1], [0, 0, 1, 1], [], []>} : vector<16x4xf32>, vector<4x8xf32>, vector<16x8xf32> -> vector<16x8xf32>
    %60 = vector.broadcast %1 : vector<1x8xf32> to vector<16x8xf32>
    %61 = arith.addf %59, %60 : vector<16x8xf32>
    %62 = vector.extract_strided_slice %61 {offsets = [0, 0], sizes = [16, 4], strides = [1, 1]} : vector<16x8xf32> to vector<16x4xf32>
    %c0_40 = arith.constant 0 : index
    %c28_41 = arith.constant 28 : index
    %63 = vector.load %arg4[%c0_40, %c28_41] : memref<16x128xf32, #tpu.memory_space<vmem>>, vector<16x4xf32>
    tpu.vector_store %arg4[%c0_40, %c28_41], %62 {strides = array<i32>} : memref<16x128xf32, #tpu.memory_space<vmem>>, vector<16x4xf32>,
    %64 = vector.extract_strided_slice %61 {offsets = [0, 4], sizes = [16, 4], strides = [1, 1]} : vector<16x8xf32> to vector<16x4xf32>
    %c0_42 = arith.constant 0 : index
    %c92 = arith.constant 92 : index
    %65 = vector.load %arg4[%c0_42, %c92] : memref<16x128xf32, #tpu.memory_space<vmem>>, vector<16x4xf32>
    tpu.vector_store %arg4[%c0_42, %c92], %64 {strides = array<i32>} : memref<16x128xf32, #tpu.memory_space<vmem>>, vector<16x4xf32>,
    %c0_43 = arith.constant 0 : index
    %c32 = arith.constant 32 : index
    %66 = vector.load %arg1[%c0_43, %c32] : memref<16x64xf32, #tpu.memory_space<vmem>>, vector<16x4xf32>
    %cst_44 = arith.constant dense<0.000000e+00> : vector<16x8xf32>
    %67 = tpu.matmul %66, %0, %cst_44 {dimension_numbers = #tpu.dot_dimension_numbers<[1], [0], [0], [1], [0, 0, 1, 1], [], []>} : vector<16x4xf32>, vector<4x8xf32>, vector<16x8xf32> -> vector<16x8xf32>
    %68 = vector.broadcast %1 : vector<1x8xf32> to vector<16x8xf32>
    %69 = arith.addf %67, %68 : vector<16x8xf32>
    %70 = vector.extract_strided_slice %69 {offsets = [0, 0], sizes = [16, 4], strides = [1, 1]} : vector<16x8xf32> to vector<16x4xf32>
    %c0_45 = arith.constant 0 : index
    %c32_46 = arith.constant 32 : index
    %71 = vector.load %arg4[%c0_45, %c32_46] : memref<16x128xf32, #tpu.memory_space<vmem>>, vector<16x4xf32>
    tpu.vector_store %arg4[%c0_45, %c32_46], %70 {strides = array<i32>} : memref<16x128xf32, #tpu.memory_space<vmem>>, vector<16x4xf32>,
    %72 = vector.extract_strided_slice %69 {offsets = [0, 4], sizes = [16, 4], strides = [1, 1]} : vector<16x8xf32> to vector<16x4xf32>
    %c0_47 = arith.constant 0 : index
    %c96 = arith.constant 96 : index
    %73 = vector.load %arg4[%c0_47, %c96] : memref<16x128xf32, #tpu.memory_space<vmem>>, vector<16x4xf32>
    tpu.vector_store %arg4[%c0_47, %c96], %72 {strides = array<i32>} : memref<16x128xf32, #tpu.memory_space<vmem>>, vector<16x4xf32>,
    %c0_48 = arith.constant 0 : index
    %c36 = arith.constant 36 : index
    %74 = vector.load %arg1[%c0_48, %c36] : memref<16x64xf32, #tpu.memory_space<vmem>>, vector<16x4xf32>
    %cst_49 = arith.constant dense<0.000000e+00> : vector<16x8xf32>
    %75 = tpu.matmul %74, %0, %cst_49 {dimension_numbers = #tpu.dot_dimension_numbers<[1], [0], [0], [1], [0, 0, 1, 1], [], []>} : vector<16x4xf32>, vector<4x8xf32>, vector<16x8xf32> -> vector<16x8xf32>
    %76 = vector.broadcast %1 : vector<1x8xf32> to vector<16x8xf32>
    %77 = arith.addf %75, %76 : vector<16x8xf32>
    %78 = vector.extract_strided_slice %77 {offsets = [0, 0], sizes = [16, 4], strides = [1, 1]} : vector<16x8xf32> to vector<16x4xf32>
    %c0_50 = arith.constant 0 : index
    %c36_51 = arith.constant 36 : index
    %79 = vector.load %arg4[%c0_50, %c36_51] : memref<16x128xf32, #tpu.memory_space<vmem>>, vector<16x4xf32>
    tpu.vector_store %arg4[%c0_50, %c36_51], %78 {strides = array<i32>} : memref<16x128xf32, #tpu.memory_space<vmem>>, vector<16x4xf32>,
    %80 = vector.extract_strided_slice %77 {offsets = [0, 4], sizes = [16, 4], strides = [1, 1]} : vector<16x8xf32> to vector<16x4xf32>
    %c0_52 = arith.constant 0 : index
    %c100 = arith.constant 100 : index
    %81 = vector.load %arg4[%c0_52, %c100] : memref<16x128xf32, #tpu.memory_space<vmem>>, vector<16x4xf32>
    tpu.vector_store %arg4[%c0_52, %c100], %80 {strides = array<i32>} : memref<16x128xf32, #tpu.memory_space<vmem>>, vector<16x4xf32>,
    %c0_53 = arith.constant 0 : index
    %c40 = arith.constant 40 : index
    %82 = vector.load %arg1[%c0_53, %c40] : memref<16x64xf32, #tpu.memory_space<vmem>>, vector<16x4xf32>
    %cst_54 = arith.constant dense<0.000000e+00> : vector<16x8xf32>
    %83 = tpu.matmul %82, %0, %cst_54 {dimension_numbers = #tpu.dot_dimension_numbers<[1], [0], [0], [1], [0, 0, 1, 1], [], []>} : vector<16x4xf32>, vector<4x8xf32>, vector<16x8xf32> -> vector<16x8xf32>
    %84 = vector.broadcast %1 : vector<1x8xf32> to vector<16x8xf32>
    %85 = arith.addf %83, %84 : vector<16x8xf32>
    %86 = vector.extract_strided_slice %85 {offsets = [0, 0], sizes = [16, 4], strides = [1, 1]} : vector<16x8xf32> to vector<16x4xf32>
    %c0_55 = arith.constant 0 : index
    %c40_56 = arith.constant 40 : index
    %87 = vector.load %arg4[%c0_55, %c40_56] : memref<16x128xf32, #tpu.memory_space<vmem>>, vector<16x4xf32>
    tpu.vector_store %arg4[%c0_55, %c40_56], %86 {strides = array<i32>} : memref<16x128xf32, #tpu.memory_space<vmem>>, vector<16x4xf32>,
    %88 = vector.extract_strided_slice %85 {offsets = [0, 4], sizes = [16, 4], strides = [1, 1]} : vector<16x8xf32> to vector<16x4xf32>
    %c0_57 = arith.constant 0 : index
    %c104 = arith.constant 104 : index
    %89 = vector.load %arg4[%c0_57, %c104] : memref<16x128xf32, #tpu.memory_space<vmem>>, vector<16x4xf32>
    tpu.vector_store %arg4[%c0_57, %c104], %88 {strides = array<i32>} : memref<16x128xf32, #tpu.memory_space<vmem>>, vector<16x4xf32>,
    %c0_58 = arith.constant 0 : index
    %c44 = arith.constant 44 : index
    %90 = vector.load %arg1[%c0_58, %c44] : memref<16x64xf32, #tpu.memory_space<vmem>>, vector<16x4xf32>
    %cst_59 = arith.constant dense<0.000000e+00> : vector<16x8xf32>
    %91 = tpu.matmul %90, %0, %cst_59 {dimension_numbers = #tpu.dot_dimension_numbers<[1], [0], [0], [1], [0, 0, 1, 1], [], []>} : vector<16x4xf32>, vector<4x8xf32>, vector<16x8xf32> -> vector<16x8xf32>
    %92 = vector.broadcast %1 : vector<1x8xf32> to vector<16x8xf32>
    %93 = arith.addf %91, %92 : vector<16x8xf32>
    %94 = vector.extract_strided_slice %93 {offsets = [0, 0], sizes = [16, 4], strides = [1, 1]} : vector<16x8xf32> to vector<16x4xf32>
    %c0_60 = arith.constant 0 : index
    %c44_61 = arith.constant 44 : index
    %95 = vector.load %arg4[%c0_60, %c44_61] : memref<16x128xf32, #tpu.memory_space<vmem>>, vector<16x4xf32>
    tpu.vector_store %arg4[%c0_60, %c44_61], %94 {strides = array<i32>} : memref<16x128xf32, #tpu.memory_space<vmem>>, vector<16x4xf32>,
    %96 = vector.extract_strided_slice %93 {offsets = [0, 4], sizes = [16, 4], strides = [1, 1]} : vector<16x8xf32> to vector<16x4xf32>
    %c0_62 = arith.constant 0 : index
    %c108 = arith.constant 108 : index
    %97 = vector.load %arg4[%c0_62, %c108] : memref<16x128xf32, #tpu.memory_space<vmem>>, vector<16x4xf32>
    tpu.vector_store %arg4[%c0_62, %c108], %96 {strides = array<i32>} : memref<16x128xf32, #tpu.memory_space<vmem>>, vector<16x4xf32>,
    %c0_63 = arith.constant 0 : index
    %c48 = arith.constant 48 : index
    %98 = vector.load %arg1[%c0_63, %c48] : memref<16x64xf32, #tpu.memory_space<vmem>>, vector<16x4xf32>
    %cst_64 = arith.constant dense<0.000000e+00> : vector<16x8xf32>
    %99 = tpu.matmul %98, %0, %cst_64 {dimension_numbers = #tpu.dot_dimension_numbers<[1], [0], [0], [1], [0, 0, 1, 1], [], []>} : vector<16x4xf32>, vector<4x8xf32>, vector<16x8xf32> -> vector<16x8xf32>
    %100 = vector.broadcast %1 : vector<1x8xf32> to vector<16x8xf32>
    %101 = arith.addf %99, %100 : vector<16x8xf32>
    %102 = vector.extract_strided_slice %101 {offsets = [0, 0], sizes = [16, 4], strides = [1, 1]} : vector<16x8xf32> to vector<16x4xf32>
    %c0_65 = arith.constant 0 : index
    %c48_66 = arith.constant 48 : index
    %103 = vector.load %arg4[%c0_65, %c48_66] : memref<16x128xf32, #tpu.memory_space<vmem>>, vector<16x4xf32>
    tpu.vector_store %arg4[%c0_65, %c48_66], %102 {strides = array<i32>} : memref<16x128xf32, #tpu.memory_space<vmem>>, vector<16x4xf32>,
    %104 = vector.extract_strided_slice %101 {offsets = [0, 4], sizes = [16, 4], strides = [1, 1]} : vector<16x8xf32> to vector<16x4xf32>
    %c0_67 = arith.constant 0 : index
    %c112 = arith.constant 112 : index
    %105 = vector.load %arg4[%c0_67, %c112] : memref<16x128xf32, #tpu.memory_space<vmem>>, vector<16x4xf32>
    tpu.vector_store %arg4[%c0_67, %c112], %104 {strides = array<i32>} : memref<16x128xf32, #tpu.memory_space<vmem>>, vector<16x4xf32>,
    %c0_68 = arith.constant 0 : index
    %c52 = arith.constant 52 : index
    %106 = vector.load %arg1[%c0_68, %c52] : memref<16x64xf32, #tpu.memory_space<vmem>>, vector<16x4xf32>
    %cst_69 = arith.constant dense<0.000000e+00> : vector<16x8xf32>
    %107 = tpu.matmul %106, %0, %cst_69 {dimension_numbers = #tpu.dot_dimension_numbers<[1], [0], [0], [1], [0, 0, 1, 1], [], []>} : vector<16x4xf32>, vector<4x8xf32>, vector<16x8xf32> -> vector<16x8xf32>
    %108 = vector.broadcast %1 : vector<1x8xf32> to vector<16x8xf32>
    %109 = arith.addf %107, %108 : vector<16x8xf32>
    %110 = vector.extract_strided_slice %109 {offsets = [0, 0], sizes = [16, 4], strides = [1, 1]} : vector<16x8xf32> to vector<16x4xf32>
    %c0_70 = arith.constant 0 : index
    %c52_71 = arith.constant 52 : index
    %111 = vector.load %arg4[%c0_70, %c52_71] : memref<16x128xf32, #tpu.memory_space<vmem>>, vector<16x4xf32>
    tpu.vector_store %arg4[%c0_70, %c52_71], %110 {strides = array<i32>} : memref<16x128xf32, #tpu.memory_space<vmem>>, vector<16x4xf32>,
    %112 = vector.extract_strided_slice %109 {offsets = [0, 4], sizes = [16, 4], strides = [1, 1]} : vector<16x8xf32> to vector<16x4xf32>
    %c0_72 = arith.constant 0 : index
    %c116 = arith.constant 116 : index
    %113 = vector.load %arg4[%c0_72, %c116] : memref<16x128xf32, #tpu.memory_space<vmem>>, vector<16x4xf32>
    tpu.vector_store %arg4[%c0_72, %c116], %112 {strides = array<i32>} : memref<16x128xf32, #tpu.memory_space<vmem>>, vector<16x4xf32>,
    %c0_73 = arith.constant 0 : index
    %c56 = arith.constant 56 : index
    %114 = vector.load %arg1[%c0_73, %c56] : memref<16x64xf32, #tpu.memory_space<vmem>>, vector<16x4xf32>
    %cst_74 = arith.constant dense<0.000000e+00> : vector<16x8xf32>
    %115 = tpu.matmul %114, %0, %cst_74 {dimension_numbers = #tpu.dot_dimension_numbers<[1], [0], [0], [1], [0, 0, 1, 1], [], []>} : vector<16x4xf32>, vector<4x8xf32>, vector<16x8xf32> -> vector<16x8xf32>
    %116 = vector.broadcast %1 : vector<1x8xf32> to vector<16x8xf32>
    %117 = arith.addf %115, %116 : vector<16x8xf32>
    %118 = vector.extract_strided_slice %117 {offsets = [0, 0], sizes = [16, 4], strides = [1, 1]} : vector<16x8xf32> to vector<16x4xf32>
    %c0_75 = arith.constant 0 : index
    %c56_76 = arith.constant 56 : index
    %119 = vector.load %arg4[%c0_75, %c56_76] : memref<16x128xf32, #tpu.memory_space<vmem>>, vector<16x4xf32>
    tpu.vector_store %arg4[%c0_75, %c56_76], %118 {strides = array<i32>} : memref<16x128xf32, #tpu.memory_space<vmem>>, vector<16x4xf32>,
    %120 = vector.extract_strided_slice %117 {offsets = [0, 4], sizes = [16, 4], strides = [1, 1]} : vector<16x8xf32> to vector<16x4xf32>
    %c0_77 = arith.constant 0 : index
    %c120 = arith.constant 120 : index
    %121 = vector.load %arg4[%c0_77, %c120] : memref<16x128xf32, #tpu.memory_space<vmem>>, vector<16x4xf32>
    tpu.vector_store %arg4[%c0_77, %c120], %120 {strides = array<i32>} : memref<16x128xf32, #tpu.memory_space<vmem>>, vector<16x4xf32>,
    %c0_78 = arith.constant 0 : index
    %c60 = arith.constant 60 : index
    %122 = vector.load %arg1[%c0_78, %c60] : memref<16x64xf32, #tpu.memory_space<vmem>>, vector<16x4xf32>
    %cst_79 = arith.constant dense<0.000000e+00> : vector<16x8xf32>
    %123 = tpu.matmul %122, %0, %cst_79 {dimension_numbers = #tpu.dot_dimension_numbers<[1], [0], [0], [1], [0, 0, 1, 1], [], []>} : vector<16x4xf32>, vector<4x8xf32>, vector<16x8xf32> -> vector<16x8xf32>
    %124 = vector.broadcast %1 : vector<1x8xf32> to vector<16x8xf32>
    %125 = arith.addf %123, %124 : vector<16x8xf32>
    %126 = vector.extract_strided_slice %125 {offsets = [0, 0], sizes = [16, 4], strides = [1, 1]} : vector<16x8xf32> to vector<16x4xf32>
    %c0_80 = arith.constant 0 : index
    %c60_81 = arith.constant 60 : index
    %127 = vector.load %arg4[%c0_80, %c60_81] : memref<16x128xf32, #tpu.memory_space<vmem>>, vector<16x4xf32>
    tpu.vector_store %arg4[%c0_80, %c60_81], %126 {strides = array<i32>} : memref<16x128xf32, #tpu.memory_space<vmem>>, vector<16x4xf32>,
    %128 = vector.extract_strided_slice %125 {offsets = [0, 4], sizes = [16, 4], strides = [1, 1]} : vector<16x8xf32> to vector<16x4xf32>
    %c0_82 = arith.constant 0 : index
    %c124 = arith.constant 124 : index
    %129 = vector.load %arg4[%c0_82, %c124] : memref<16x128xf32, #tpu.memory_space<vmem>>, vector<16x4xf32>
    tpu.vector_store %arg4[%c0_82, %c124], %128 {strides = array<i32>} : memref<16x128xf32, #tpu.memory_space<vmem>>, vector<16x4xf32>,
    return
  }
  func.func @transform_0(%arg0: i32) -> (i32, i32) {
    %c0_i32 = arith.constant 0 : i32
    %c0_i32_0 = arith.constant 0 : i32
    return %arg0, %c0_i32 : i32, i32
  }
  func.func @transform_1(%arg0: i32) -> (i32, i32) {
    %c0_i32 = arith.constant 0 : i32
    %c0_i32_0 = arith.constant 0 : i32
    %c0_i32_1 = arith.constant 0 : i32
    return %c0_i32, %c0_i32_0 : i32, i32
  }
  func.func @transform_2(%arg0: i32) -> (i32, i32) {
    %c0_i32 = arith.constant 0 : i32
    %c0_i32_0 = arith.constant 0 : i32
    %c0_i32_1 = arith.constant 0 : i32
    return %c0_i32, %c0_i32_0 : i32, i32
  }
  func.func @transform_3(%arg0: i32) -> (i32, i32) {
    %c0_i32 = arith.constant 0 : i32
    %c0_i32_0 = arith.constant 0 : i32
    return %arg0, %c0_i32 : i32, i32
  }
}

</mosaic_0001>

<llo_original>
// kernel: tpu_custom_call.1
$region0: #{tpu_custom_call.1}
  #allocation0 [shape = 'u32[]', space=smem, size = 0x4, offset = 0x4, fixed_abs, tag = 'smem constant byte address 0x4 - core index']
  #allocation1 [shape = 'u32[144,128]{1,0:T(1,128)}', space=vmem, size = 0x12000, scoped, tag = 'internal scratch']
  %s0 = inlined_call_operand.hbm [shape: f32[32,64], index: 0, kind: input, shape index: {}]
  %s1 = inlined_call_operand.hbm [shape: f32[4,8], index: 1, kind: input, shape index: {}]
  %s2 = inlined_call_operand.vmem [shape: f32[1,8], index: 2, kind: input, shape index: {}]
  %s3 = inlined_call_operand.hbm [shape: f32[32,128], index: 3, kind: output, shape index: {}]
  %s4 = sld [smem:[#allocation0]]
  $region53: #{tpu_custom_call.1} parent=0
    _
  %s6 = ssub.s32 1, %s4
  %s7 = scalar_select 0, %s6, %s4
  $region1: #{tpu_custom_call.1} parent=0
    #allocation2 [shape = 'u8[16384]{0}', space=vmem, size = 0x4000, scoped, tag = 'input window, operand 0']
    #allocation3 [shape = 's32[2]{0}', space=sflag, size = 0x8, scoped, tag = 'scoped memory for tpu_custom_call.1']
    #allocation4 [shape = 's32[2]{0}', space=sflag, size = 0x8, scoped, tag = 'scoped memory for tpu_custom_call.1']
    #allocation5 [shape = 'u8[2048]{0}', space=vmem, size = 0x800, scoped, tag = 'input window, operand 1, single buffered']
    #allocation6 [shape = 's32[1]{0}', space=sflag, size = 0x4, scoped, tag = 'scoped memory for tpu_custom_call.1']
    #allocation7 [shape = 'u8[16384]{0}', space=vmem, size = 0x4000, scoped, tag = 'output window, operand 0']
    %8 = vsyncpa [#allocation3], 0
    %s9 = scalar_lea.sflag [#allocation3], 1
    %10 = vsyncpa %s9, 0
    %11 = vsyncpa [#allocation6], 0
    %12 = vsyncpa [#allocation4], 0
    %s13 = scalar_lea.sflag [#allocation4], 1
    %14 = vsyncpa %s13, 0
    loop: start=0, step=1, limit=4
    $region2: #{tpu_custom_call.1} parent=1 // loop_pre_header
      _
    $region3: #{tpu_custom_call.1} parent=1 // loop_header
      %s16 = sphi 0, %s20
      %p17 = scmp.ge.s32.totalorder %s16, 4
      %s26 = sphi 0, %s28
      %s29 = sphi 0, %s26
      %s30 = sphi 0, %s29
      %s46 = sphi 0, %s30
      %s50 = sphi 0, %s50
      %s52 = sphi 0, %s50
      %s53 = sphi 0, %s52
      %s67 = sphi 0, %s53
      %s71 = sphi 0, %s71
      %s73 = sphi 0, %s71
      %s74 = sphi 0, %s73
      %s88 = sphi 0, %s74
      %s94 = sphi 0, %s96
      %s97 = sphi 0, %s94
      %s98 = sphi 0, %s97
      %s114 = sphi 0, %s98
    $region4: #{tpu_custom_call.1} parent=1 // loop_header_branch
      %19 = sbr.rel (%p17) target = $region8
    $region5: #{tpu_custom_call.1} parent=1 // loop_body
      %s21 = ssub.s32 %s16, 1
      %s22 = ssub.s32 %s16, 2
      %s23 = sadd.s32 %s16, 1
      %s24 = ssub.s32 %s16, %s23
      %p25 = scmp.eq.s32.totalorder %s24, 0
      %s27 = sadd.s32 %s26, 1
      %s28 = scalar_select %p25, %s26, %s27
      %p31 = pneg %p25
      %p32 = scmp.eq.s32.totalorder %s16, 1
      %p33 = por %p31, %p32
      %p34 = scmp.ne.s32.totalorder %s26, %s29
      %p35 = scmp.eq.s32.totalorder %s16, 0
      %p36 = por %p34, %p35
      %p37 = scmp.ne.s32.totalorder %s26, %s29
      %p38 = scmp.eq.s32.totalorder %s21, 1
      %p39 = por %p37, %p38
      %p40 = scmp.ne.s32.totalorder %s29, %s30
      %p41 = scmp.eq.s32.totalorder %s21, 0
      %p42 = por %p40, %p41
      %p43 = scmp.ne.s32.totalorder %s29, %s30
      %p44 = scmp.eq.s32.totalorder %s22, 1
      %p45 = por %p43, %p44
      %p47 = scmp.ne.s32.totalorder %s30, %s46
      %p48 = scmp.eq.s32.totalorder %s22, 0
      %p49 = por %p47, %p48
      %s51 = sadd.s32 %s50, 1
      %p54 = scmp.eq.s32.totalorder %s16, 1
      %p55 = scmp.ne.s32.totalorder %s50, %s52
      %p56 = scmp.eq.s32.totalorder %s16, 0
      %p57 = por %p55, %p56
      %p58 = scmp.ne.s32.totalorder %s50, %s52
      %p59 = scmp.eq.s32.totalorder %s21, 1
      %p60 = por %p58, %p59
      %p61 = scmp.ne.s32.totalorder %s52, %s53
      %p62 = scmp.eq.s32.totalorder %s21, 0
      %p63 = por %p61, %p62
      %p64 = scmp.ne.s32.totalorder %s52, %s53
      %p65 = scmp.eq.s32.totalorder %s22, 1
      %p66 = por %p64, %p65
      %p68 = scmp.ne.s32.totalorder %s53, %s67
      %p69 = scmp.eq.s32.totalorder %s22, 0
      %p70 = por %p68, %p69
      %s72 = sadd.s32 %s71, 1
      %p75 = scmp.eq.s32.totalorder %s16, 1
      %p76 = scmp.ne.s32.totalorder %s71, %s73
      %p77 = scmp.eq.s32.totalorder %s16, 0
      %p78 = por %p76, %p77
      %p79 = scmp.ne.s32.totalorder %s71, %s73
      %p80 = scmp.eq.s32.totalorder %s21, 1
      %p81 = por %p79, %p80
      %p82 = scmp.ne.s32.totalorder %s73, %s74
      %p83 = scmp.eq.s32.totalorder %s21, 0
      %p84 = por %p82, %p83
      %p85 = scmp.ne.s32.totalorder %s73, %s74
      %p86 = scmp.eq.s32.totalorder %s22, 1
      %p87 = por %p85, %p86
      %p89 = scmp.ne.s32.totalorder %s74, %s88
      %p90 = scmp.eq.s32.totalorder %s22, 0
      %p91 = por %p89, %p90
      %s92 = ssub.s32 %s16, %s23
      %p93 = scmp.eq.s32.totalorder %s92, 0
      %s95 = sadd.s32 %s94, 1
      %s96 = scalar_select %p93, %s94, %s95
      %p99 = pneg %p93
      %p100 = scmp.eq.s32.totalorder %s16, 1
      %p101 = por %p99, %p100
      %p102 = scmp.ne.s32.totalorder %s94, %s97
      %p103 = scmp.eq.s32.totalorder %s16, 0
      %p104 = por %p102, %p103
      %p105 = scmp.ne.s32.totalorder %s94, %s97
      %p106 = scmp.eq.s32.totalorder %s21, 1
      %p107 = por %p105, %p106
      %p108 = scmp.ne.s32.totalorder %s97, %s98
      %p109 = scmp.eq.s32.totalorder %s21, 0
      %p110 = por %p108, %p109
      %p111 = scmp.ne.s32.totalorder %s97, %s98
      %p112 = scmp.eq.s32.totalorder %s22, 1
      %p113 = por %p111, %p112
      %p115 = scmp.ne.s32.totalorder %s98, %s114
      %p116 = scmp.eq.s32.totalorder %s22, 0
      %p117 = por %p115, %p116
      %p118 = scmp.le.s32.totalorder 1, %s16
      %p119 = scmp.lt.s32.totalorder %s16, 3
      %p120 = pnand %p118, %p119
      %p121 = pneg %p120
      // Predicated region
      $region9: #{tpu_custom_call.1} parent=5 // pred_check
        _
      $region10: #{tpu_custom_call.1} parent=5 // pred_check_branch
        %123 = sbr.rel (%p120) target = $region12
      $region11: #{tpu_custom_call.1} parent=5 // pred_region
        %s124 = ssub.s32 %s16, 1
        // Predicated region
        $region13: #{tpu_custom_call.1} parent=11 // pred_check
          %p125 = pneg %p63
        $region14: #{tpu_custom_call.1} parent=11 // pred_check_branch
          %127 = sbr.rel (%p125) target = $region16
        $region15: #{tpu_custom_call.1} parent=11 // pred_region
          %s129 = ssub.s32 64, 64
          %130 = vsyncadd [#allocation6], %s129
          %s132 = sshll.u32 [#allocation5], 4
          %s133 = int_to_ptr.vmem [resolvable:$true] %s132
          %135 = dma.hbm_to_vmem [thread:$0]  %s1, 64, %s133, [#allocation6]
        $region16: #{tpu_custom_call.1} parent=11 // pred_fallthru
          _
        // Predicated region
        $region17: #{tpu_custom_call.1} parent=11 // pred_check
          %p136 = pneg %p84
        $region18: #{tpu_custom_call.1} parent=11 // pred_check_branch
          %138 = sbr.rel (%p136) target = $region20
        $region19: #{tpu_custom_call.1} parent=11 // pred_region
          _
        $region20: #{tpu_custom_call.1} parent=11 // pred_fallthru
          _
      $region12: #{tpu_custom_call.1} parent=5 // pred_fallthru
        _
      %p139 = scmp.lt.s32.totalorder %s16, 2
      // Predicated region
      $region21: #{tpu_custom_call.1} parent=5 // pred_check
        %p140 = pneg %p139
      $region22: #{tpu_custom_call.1} parent=5 // pred_check_branch
        %142 = sbr.rel (%p140) target = $region24
      $region23: #{tpu_custom_call.1} parent=5 // pred_region
        // Predicated region
        $region25: #{tpu_custom_call.1} parent=23 // pred_check
          %p143 = pneg %p36
        $region26: #{tpu_custom_call.1} parent=23 // pred_check_branch
          %145 = sbr.rel (%p143) target = $region28
        $region27: #{tpu_custom_call.1} parent=23 // pred_region
          %s146 = sand.u32 %s26, 1
          %s147 = scalar_lea.sflag [#allocation3], %s146
          %s148 = sand.u32 %s26, 1
          %s149 = smul.addr %s148, 16
          %s150 = scalar_lea.vmem [#allocation2], %s149
          %s151 = smul.u32 2, %s16
          %s153 = ssub.s32 256, 256
          %154 = vsyncadd %s147, %s153
          %s155 = smul.addr %s151, 128
          %s156 = scalar_lea.hbm %s0, %s155
          %s157 = sshll.u32 %s150, 4
          %s158 = int_to_ptr.vmem [resolvable:$true] %s157
          %163 = dma.hbm_to_vmem [thread:$0]  %s156, 256, %s158, %s147, 128, 128, 8
        $region28: #{tpu_custom_call.1} parent=23 // pred_fallthru
          _
      $region24: #{tpu_custom_call.1} parent=5 // pred_fallthru
        _
      %p164 = scmp.le.s32.totalorder 1, %s16
      %p165 = scmp.lt.s32.totalorder %s16, 3
      %p166 = pnand %p164, %p165
      %p167 = pneg %p166
      // Predicated region
      $region29: #{tpu_custom_call.1} parent=5 // pred_check
        _
      $region30: #{tpu_custom_call.1} parent=5 // pred_check_branch
        %169 = sbr.rel (%p166) target = $region32
      $region31: #{tpu_custom_call.1} parent=5 // pred_region
        %s170 = ssub.s32 %s16, 1
        %s171 = sand.u32 %s29, 1
        %s172 = scalar_lea.sflag [#allocation3], %s171
        %s173 = sand.u32 %s29, 1
        %s174 = smul.addr %s173, 16
        %s175 = scalar_lea.vmem [#allocation2], %s174
        // Predicated region
        $region33: #{tpu_custom_call.1} parent=31 // pred_check
          %p176 = pneg %p42
        $region34: #{tpu_custom_call.1} parent=31 // pred_check_branch
          %178 = sbr.rel (%p176) target = $region36
        $region35: #{tpu_custom_call.1} parent=31 // pred_region
          %179 = dma.done %s172, 256
        $region36: #{tpu_custom_call.1} parent=31 // pred_fallthru
          _
        // Predicated region
        $region37: #{tpu_custom_call.1} parent=31 // pred_check
          %p180 = pneg %p63
        $region38: #{tpu_custom_call.1} parent=31 // pred_check_branch
          %182 = sbr.rel (%p180) target = $region40
        $region39: #{tpu_custom_call.1} parent=31 // pred_region
          %183 = dma.done [#allocation6], 64
        $region40: #{tpu_custom_call.1} parent=31 // pred_fallthru
          _
        %s184 = sand.u32 %s29, 1
        %s185 = scalar_lea.sflag [#allocation3], %s184
        %s186 = sand.u32 %s29, 1
        %s187 = smul.addr %s186, 16
        %s188 = scalar_lea.vmem [#allocation2], %s187
        %p189 = pneg %p42
        %p190 = pneg %p39
        %p191 = pneg %p63
        %p192 = pneg %p60
        %p193 = pneg %p84
        %p194 = pneg %p81
        %p195 = pneg %p110
        %p196 = pneg %p107
        %s197 = sand.u32 %s97, 1
        %s198 = scalar_lea.sflag [#allocation4], %s197
        %s199 = sand.u32 %s97, 1
        %s200 = smul.addr %s199, 16
        %s201 = scalar_lea.vmem [#allocation7], %s200
        %s202 = smul.u32 2, %s21
        %s203 = smul.u32 2, %s21
        %v204 = vld [vmem:[#allocation5] sm:$0xf]
        %v205 = vld [vmem:[%s2] sm:$0x1]
        %v206 = vld [vmem:[%s175] sm:$0xff]
        %v207 = vld [vmem:[%s175 + $0x8] sm:$0xff]
        %v209 = vlaneseq
        %v210 = vshrl.u32 %v209, 7
        %v211 = vsub.s32 0, %v210
        %v212 = vrot.slane %v205, %v211
        %vm214 = vcmask 31744
        %v216 = vsel %vm214, %v206, 0
        %v219 = vsel %vm214, %v207, 0
        %vm221 = vcmask 1043456
        %v223 = vsel %vm221, %v204, 0
        %225 = vmatprep.subr.mxu0 0.0
        %226 = vmatpush1.msra.mxu0 0.0
        %227 = vmatprep.subr.mxu0 0.0
        %228 = vmatpush1.msra.mxu0 0.0
        %229 = vmatprep.subr.mxu0 0.0
        %230 = vmatpush1.msra.mxu0 0.0
        %231 = vmatprep.subr.mxu0 0.0
        %232 = vmatpush1.msra.mxu0 0.0
        %233 = vmatprep.subr.mxu0 0.0
        %234 = vmatpush1.msra.mxu0 0.0
        %235 = vmatprep.subr.mxu0 0.0
        %236 = vmatpush1.msra.mxu0 0.0
        %237 = vmatprep.subr.mxu0 0.0
        %238 = vmatpush1.msra.mxu0 0.0
        %239 = vmatprep.subr.mxu0 0.0
        %240 = vmatpush1.msra.mxu0 0.0
        %241 = vmatprep.subr.mxu0 0.0
        %242 = vmatpush1.msra.mxu0 0.0
        %243 = vmatprep.subr.mxu0 0.0
        %244 = vmatpush1.msra.mxu0 0.0
        %245 = vmatprep.subr.mxu0 0.0
        %246 = vmatpush1.msra.mxu0 0.0
        %247 = vmatprep.subr.mxu0 0.0
        %248 = vmatpush1.msra.mxu0 0.0
        %249 = vmatprep.subr.mxu0 0.0
        %250 = vmatpush1.msra.mxu0 0.0
        %251 = vmatprep.subr.mxu0 0.0
        %252 = vmatpush1.msra.mxu0 0.0
        %253 = vmatprep.subr.mxu0 0.0
        %254 = vmatpush1.msra.mxu0 0.0
        %255 = vmatprep.subr.mxu0 0.0
        %256 = vmatpush1.msra.mxu0 %v223
        %257 = vmatprep.subr.mxu0 0.0
        %258 = vmatpush2.msra.mxu0 0.0
        %259 = vmatprep.subr.mxu0 0.0
        %260 = vmatpush2.msra.mxu0 0.0
        %261 = vmatprep.subr.mxu0 0.0
        %262 = vmatpush2.msra.mxu0 0.0
        %263 = vmatprep.subr.mxu0 0.0
        %264 = vmatpush2.msra.mxu0 0.0
        %265 = vmatprep.subr.mxu0 0.0
        %266 = vmatpush2.msra.mxu0 0.0
        %267 = vmatprep.subr.mxu0 0.0
        %268 = vmatpush2.msra.mxu0 0.0
        %269 = vmatprep.subr.mxu0 0.0
        %270 = vmatpush2.msra.mxu0 0.0
        %271 = vmatprep.subr.mxu0 0.0
        %272 = vmatpush2.msra.mxu0 0.0
        %273 = vmatprep.subr.mxu0 0.0
        %274 = vmatpush2.msra.mxu0 0.0
        %275 = vmatprep.subr.mxu0 0.0
        %276 = vmatpush2.msra.mxu0 0.0
        %277 = vmatprep.subr.mxu0 0.0
        %278 = vmatpush2.msra.mxu0 0.0
        %279 = vmatprep.subr.mxu0 0.0
        %280 = vmatpush2.msra.mxu0 0.0
        %281 = vmatprep.subr.mxu0 0.0
        %282 = vmatpush2.msra.mxu0 0.0
        %283 = vmatprep.subr.mxu0 0.0
        %284 = vmatpush2.msra.mxu0 0.0
        %285 = vmatprep.subr.mxu0 0.0
        %286 = vmatpush2.msra.mxu0 0.0
        %287 = vmatprep.subr.mxu0 0.0
        %288 = vmatpush2.msra.mxu0 0.0
        %289 = vmatprep.mubr.f32.mxu0 0.0
        %290 = vmatmul.mubr.f32.gmra.mxu0 %v216
        %v291 = vpop.f32.mrf.mxu0
        %v292 = vadd.f32 %v212, %v291
        %v293 = vpop.f32.mrf.mxu0
        %294 = vmatprep.mubr.f32.mxu0 0.0
        %295 = vmatmul.mubr.f32.gmra.mxu0 %v219
        %v296 = vpop.f32.mrf.mxu0
        %v297 = vadd.f32 %v212, %v296
        %v298 = vpop.f32.mrf.mxu0
        %299 = vdwg.mxu0
        %300 = vst.msk [vmem:[%s201] sm:$0xff] %vm214, %v292
        %301 = vst.msk [vmem:[%s201 + $0x8] sm:$0xff] %vm214, %v297
        %304 = vrot.lane.b32.xlu0 %v292, 60
        %v305 = vpop.permute.xlu0 %304
        %306 = vrot.lane.b32.xlu0 %v297, 60
        %v307 = vpop.permute.xlu0 %306
        %vm310 = vcmask 556544
        %311 = vst.msk [vmem:[%s201] sm:$0xff] %vm310, %v305
        %312 = vst.msk [vmem:[%s201 + $0x8] sm:$0xff] %vm310, %v307
        %v313 = vld [vmem:[%s175] sm:$0xff]
        %v314 = vld [vmem:[%s175 + $0x8] sm:$0xff]
        %317 = vrot.lane.b32.xlu0 %v313, 124
        %v318 = vpop.permute.xlu0 %317
        %319 = vrot.lane.b32.xlu0 %v314, 124
        %v320 = vpop.permute.xlu0 %319
        %v321 = vsel %vm214, %v318, 0
        %v323 = vsel %vm214, %v320, 0
        %325 = vmatprep.subr.mxu0 0.0
        %326 = vmatpush1.msra.mxu0 0.0
        %327 = vmatprep.subr.mxu0 0.0
        %328 = vmatpush1.msra.mxu0 0.0
        %329 = vmatprep.subr.mxu0 0.0
        %330 = vmatpush1.msra.mxu0 0.0
        %331 = vmatprep.subr.mxu0 0.0
        %332 = vmatpush1.msra.mxu0 0.0
        %333 = vmatprep.subr.mxu0 0.0
        %334 = vmatpush1.msra.mxu0 0.0
        %335 = vmatprep.subr.mxu0 0.0
        %336 = vmatpush1.msra.mxu0 0.0
        %337 = vmatprep.subr.mxu0 0.0
        %338 = vmatpush1.msra.mxu0 0.0
        %339 = vmatprep.subr.mxu0 0.0
        %340 = vmatpush1.msra.mxu0 0.0
        %341 = vmatprep.subr.mxu0 0.0
        %342 = vmatpush1.msra.mxu0 0.0
        %343 = vmatprep.subr.mxu0 0.0
        %344 = vmatpush1.msra.mxu0 0.0
        %345 = vmatprep.subr.mxu0 0.0
        %346 = vmatpush1.msra.mxu0 0.0
        %347 = vmatprep.subr.mxu0 0.0
        %348 = vmatpush1.msra.mxu0 0.0
        %349 = vmatprep.subr.mxu0 0.0
        %350 = vmatpush1.msra.mxu0 0.0
        %351 = vmatprep.subr.mxu0 0.0
        %352 = vmatpush1.msra.mxu0 0.0
        %353 = vmatprep.subr.mxu0 0.0
        %354 = vmatpush1.msra.mxu0 0.0
        %355 = vmatprep.subr.mxu0 0.0
        %356 = vmatpush1.msra.mxu0 %v223
        %357 = vmatprep.subr.mxu0 0.0
        %358 = vmatpush2.msra.mxu0 0.0
        %359 = vmatprep.subr.mxu0 0.0
        %360 = vmatpush2.msra.mxu0 0.0
        %361 = vmatprep.subr.mxu0 0.0
        %362 = vmatpush2.msra.mxu0 0.0
        %363 = vmatprep.subr.mxu0 0.0
        %364 = vmatpush2.msra.mxu0 0.0
        %365 = vmatprep.subr.mxu0 0.0
        %366 = vmatpush2.msra.mxu0 0.0
        %367 = vmatprep.subr.mxu0 0.0
        %368 = vmatpush2.msra.mxu0 0.0
        %369 = vmatprep.subr.mxu0 0.0
        %370 = vmatpush2.msra.mxu0 0.0
        %371 = vmatprep.subr.mxu0 0.0
        %372 = vmatpush2.msra.mxu0 0.0
        %373 = vmatprep.subr.mxu0 0.0
        %374 = vmatpush2.msra.mxu0 0.0
        %375 = vmatprep.subr.mxu0 0.0
        %376 = vmatpush2.msra.mxu0 0.0
        %377 = vmatprep.subr.mxu0 0.0
        %378 = vmatpush2.msra.mxu0 0.0
        %379 = vmatprep.subr.mxu0 0.0
        %380 = vmatpush2.msra.mxu0 0.0
        %381 = vmatprep.subr.mxu0 0.0
        %382 = vmatpush2.msra.mxu0 0.0
        %383 = vmatprep.subr.mxu0 0.0
        %384 = vmatpush2.msra.mxu0 0.0
        %385 = vmatprep.subr.mxu0 0.0
        %386 = vmatpush2.msra.mxu0 0.0
        %387 = vmatprep.subr.mxu0 0.0
        %388 = vmatpush2.msra.mxu0 0.0
        %389 = vmatprep.mubr.f32.mxu0 0.0
        %390 = vmatmul.mubr.f32.gmra.mxu0 %v321
        %v391 = vpop.f32.mrf.mxu0
        %v392 = vadd.f32 %v212, %v391
        %v393 = vpop.f32.mrf.mxu0
        %394 = vmatprep.mubr.f32.mxu0 0.0
        %395 = vmatmul.mubr.f32.gmra.mxu0 %v323
        %v396 = vpop.f32.mrf.mxu0
        %v397 = vadd.f32 %v212, %v396
        %v398 = vpop.f32.mrf.mxu0
        %399 = vdwg.mxu0
        %402 = vrot.lane.b32.xlu0 %v392, 4
        %v403 = vpop.permute.xlu0 %402
        %404 = vrot.lane.b32.xlu0 %v397, 4
        %v405 = vpop.permute.xlu0 %404
        %vm408 = vcmask 64544
        %409 = vst.msk [vmem:[%s201] sm:$0xff] %vm408, %v403
        %410 = vst.msk [vmem:[%s201 + $0x8] sm:$0xff] %vm408, %v405
        %411 = vrot.lane.b32.xlu0 %v392, 64
        %v412 = vpop.permute.xlu0 %411
        %413 = vrot.lane.b32.xlu0 %v397, 64
        %v414 = vpop.permute.xlu0 %413
        %vm417 = vcmask 589344
        %418 = vst.msk [vmem:[%s201] sm:$0xff] %vm417, %v412
        %419 = vst.msk [vmem:[%s201 + $0x8] sm:$0xff] %vm417, %v414
        %v420 = vld [vmem:[%s175] sm:$0xff]
        %v421 = vld [vmem:[%s175 + $0x8] sm:$0xff]
        %424 = vrot.lane.b32.xlu0 %v420, 120
        %v425 = vpop.permute.xlu0 %424
        %426 = vrot.lane.b32.xlu0 %v421, 120
        %v427 = vpop.permute.xlu0 %426
        %v428 = vsel %vm214, %v425, 0
        %v430 = vsel %vm214, %v427, 0
        %432 = vmatprep.subr.mxu0 0.0
        %433 = vmatpush1.msra.mxu0 0.0
        %434 = vmatprep.subr.mxu0 0.0
        %435 = vmatpush1.msra.mxu0 0.0
        %436 = vmatprep.subr.mxu0 0.0
        %437 = vmatpush1.msra.mxu0 0.0
        %438 = vmatprep.subr.mxu0 0.0
        %439 = vmatpush1.msra.mxu0 0.0
        %440 = vmatprep.subr.mxu0 0.0
        %441 = vmatpush1.msra.mxu0 0.0
        %442 = vmatprep.subr.mxu0 0.0
        %443 = vmatpush1.msra.mxu0 0.0
        %444 = vmatprep.subr.mxu0 0.0
        %445 = vmatpush1.msra.mxu0 0.0
        %446 = vmatprep.subr.mxu0 0.0
        %447 = vmatpush1.msra.mxu0 0.0
        %448 = vmatprep.subr.mxu0 0.0
        %449 = vmatpush1.msra.mxu0 0.0
        %450 = vmatprep.subr.mxu0 0.0
        %451 = vmatpush1.msra.mxu0 0.0
        %452 = vmatprep.subr.mxu0 0.0
        %453 = vmatpush1.msra.mxu0 0.0
        %454 = vmatprep.subr.mxu0 0.0
        %455 = vmatpush1.msra.mxu0 0.0
        %456 = vmatprep.subr.mxu0 0.0
        %457 = vmatpush1.msra.mxu0 0.0
        %458 = vmatprep.subr.mxu0 0.0
        %459 = vmatpush1.msra.mxu0 0.0
        %460 = vmatprep.subr.mxu0 0.0
        %461 = vmatpush1.msra.mxu0 0.0
        %462 = vmatprep.subr.mxu0 0.0
        %463 = vmatpush1.msra.mxu0 %v223
        %464 = vmatprep.subr.mxu0 0.0
        %465 = vmatpush2.msra.mxu0 0.0
        %466 = vmatprep.subr.mxu0 0.0
        %467 = vmatpush2.msra.mxu0 0.0
        %468 = vmatprep.subr.mxu0 0.0
        %469 = vmatpush2.msra.mxu0 0.0
        %470 = vmatprep.subr.mxu0 0.0
        %471 = vmatpush2.msra.mxu0 0.0
        %472 = vmatprep.subr.mxu0 0.0
        %473 = vmatpush2.msra.mxu0 0.0
        %474 = vmatprep.subr.mxu0 0.0
        %475 = vmatpush2.msra.mxu0 0.0
        %476 = vmatprep.subr.mxu0 0.0
        %477 = vmatpush2.msra.mxu0 0.0
        %478 = vmatprep.subr.mxu0 0.0
        %479 = vmatpush2.msra.mxu0 0.0
        %480 = vmatprep.subr.mxu0 0.0
        %481 = vmatpush2.msra.mxu0 0.0
        %482 = vmatprep.subr.mxu0 0.0
        %483 = vmatpush2.msra.mxu0 0.0
        %484 = vmatprep.subr.mxu0 0.0
        %485 = vmatpush2.msra.mxu0 0.0
        %486 = vmatprep.subr.mxu0 0.0
        %487 = vmatpush2.msra.mxu0 0.0
        %488 = vmatprep.subr.mxu0 0.0
        %489 = vmatpush2.msra.mxu0 0.0
        %490 = vmatprep.subr.mxu0 0.0
        %491 = vmatpush2.msra.mxu0 0.0
        %492 = vmatprep.subr.mxu0 0.0
        %493 = vmatpush2.msra.mxu0 0.0
        %494 = vmatprep.subr.mxu0 0.0
        %495 = vmatpush2.msra.mxu0 0.0
        %496 = vmatprep.mubr.f32.mxu0 0.0
        %497 = vmatmul.mubr.f32.gmra.mxu0 %v428
        %v498 = vpop.f32.mrf.mxu0
        %v499 = vadd.f32 %v212, %v498
        %v500 = vpop.f32.mrf.mxu0
        %501 = vmatprep.mubr.f32.mxu0 0.0
        %502 = vmatmul.mubr.f32.gmra.mxu0 %v430
        %v503 = vpop.f32.mrf.mxu0
        %v504 = vadd.f32 %v212, %v503
        %v505 = vpop.f32.mrf.mxu0
        %506 = vdwg.mxu0
        %509 = vrot.lane.b32.xlu0 %v499, 8
        %v510 = vpop.permute.xlu0 %509
        %511 = vrot.lane.b32.xlu0 %v504, 8
        %v512 = vpop.permute.xlu0 %511
        %vm515 = vcmask 97344
        %516 = vst.msk [vmem:[%s201] sm:$0xff] %vm515, %v510
        %517 = vst.msk [vmem:[%s201 + $0x8] sm:$0xff] %vm515, %v512
        %518 = vrot.lane.b32.xlu0 %v499, 68
        %v519 = vpop.permute.xlu0 %518
        %520 = vrot.lane.b32.xlu0 %v504, 68
        %v521 = vpop.permute.xlu0 %520
        %vm524 = vcmask 622144
        %525 = vst.msk [vmem:[%s201] sm:$0xff] %vm524, %v519
        %526 = vst.msk [vmem:[%s201 + $0x8] sm:$0xff] %vm524, %v521
        %v527 = vld [vmem:[%s175] sm:$0xff]
        %v528 = vld [vmem:[%s175 + $0x8] sm:$0xff]
        %531 = vrot.lane.b32.xlu0 %v527, 116
        %v532 = vpop.permute.xlu0 %531
        %533 = vrot.lane.b32.xlu0 %v528, 116
        %v534 = vpop.permute.xlu0 %533
        %v535 = vsel %vm214, %v532, 0
        %v537 = vsel %vm214, %v534, 0
        %539 = vmatprep.subr.mxu0 0.0
        %540 = vmatpush1.msra.mxu0 0.0
        %541 = vmatprep.subr.mxu0 0.0
        %542 = vmatpush1.msra.mxu0 0.0
        %543 = vmatprep.subr.mxu0 0.0
        %544 = vmatpush1.msra.mxu0 0.0
        %545 = vmatprep.subr.mxu0 0.0
        %546 = vmatpush1.msra.mxu0 0.0
        %547 = vmatprep.subr.mxu0 0.0
        %548 = vmatpush1.msra.mxu0 0.0
        %549 = vmatprep.subr.mxu0 0.0
        %550 = vmatpush1.msra.mxu0 0.0
        %551 = vmatprep.subr.mxu0 0.0
        %552 = vmatpush1.msra.mxu0 0.0
        %553 = vmatprep.subr.mxu0 0.0
        %554 = vmatpush1.msra.mxu0 0.0
        %555 = vmatprep.subr.mxu0 0.0
        %556 = vmatpush1.msra.mxu0 0.0
        %557 = vmatprep.subr.mxu0 0.0
        %558 = vmatpush1.msra.mxu0 0.0
        %559 = vmatprep.subr.mxu0 0.0
        %560 = vmatpush1.msra.mxu0 0.0
        %561 = vmatprep.subr.mxu0 0.0
        %562 = vmatpush1.msra.mxu0 0.0
        %563 = vmatprep.subr.mxu0 0.0
        %564 = vmatpush1.msra.mxu0 0.0
        %565 = vmatprep.subr.mxu0 0.0
        %566 = vmatpush1.msra.mxu0 0.0
        %567 = vmatprep.subr.mxu0 0.0
        %568 = vmatpush1.msra.mxu0 0.0
        %569 = vmatprep.subr.mxu0 0.0
        %570 = vmatpush1.msra.mxu0 %v223
        %571 = vmatprep.subr.mxu0 0.0
        %572 = vmatpush2.msra.mxu0 0.0
        %573 = vmatprep.subr.mxu0 0.0
        %574 = vmatpush2.msra.mxu0 0.0
        %575 = vmatprep.subr.mxu0 0.0
        %576 = vmatpush2.msra.mxu0 0.0
        %577 = vmatprep.subr.mxu0 0.0
        %578 = vmatpush2.msra.mxu0 0.0
        %579 = vmatprep.subr.mxu0 0.0
        %580 = vmatpush2.msra.mxu0 0.0
        %581 = vmatprep.subr.mxu0 0.0
        %582 = vmatpush2.msra.mxu0 0.0
        %583 = vmatprep.subr.mxu0 0.0
        %584 = vmatpush2.msra.mxu0 0.0
        %585 = vmatprep.subr.mxu0 0.0
        %586 = vmatpush2.msra.mxu0 0.0
        %587 = vmatprep.subr.mxu0 0.0
        %588 = vmatpush2.msra.mxu0 0.0
        %589 = vmatprep.subr.mxu0 0.0
        %590 = vmatpush2.msra.mxu0 0.0
        %591 = vmatprep.subr.mxu0 0.0
        %592 = vmatpush2.msra.mxu0 0.0
        %593 = vmatprep.subr.mxu0 0.0
        %594 = vmatpush2.msra.mxu0 0.0
        %595 = vmatprep.subr.mxu0 0.0
        %596 = vmatpush2.msra.mxu0 0.0
        %597 = vmatprep.subr.mxu0 0.0
        %598 = vmatpush2.msra.mxu0 0.0
        %599 = vmatprep.subr.mxu0 0.0
        %600 = vmatpush2.msra.mxu0 0.0
        %601 = vmatprep.subr.mxu0 0.0
        %602 = vmatpush2.msra.mxu0 0.0
        %603 = vmatprep.mubr.f32.mxu0 0.0
        %604 = vmatmul.mubr.f32.gmra.mxu0 %v535
        %v605 = vpop.f32.mrf.mxu0
        %v606 = vadd.f32 %v212, %v605
        %v607 = vpop.f32.mrf.mxu0
        %608 = vmatprep.mubr.f32.mxu0 0.0
        %609 = vmatmul.mubr.f32.gmra.mxu0 %v537
        %v610 = vpop.f32.mrf.mxu0
        %v611 = vadd.f32 %v212, %v610
        %v612 = vpop.f32.mrf.mxu0
        %613 = vdwg.mxu0
        %616 = vrot.lane.b32.xlu0 %v606, 12
        %v617 = vpop.permute.xlu0 %616
        %618 = vrot.lane.b32.xlu0 %v611, 12
        %v619 = vpop.permute.xlu0 %618
        %vm622 = vcmask 130144
        %623 = vst.msk [vmem:[%s201] sm:$0xff] %vm622, %v617
        %624 = vst.msk [vmem:[%s201 + $0x8] sm:$0xff] %vm622, %v619
        %625 = vrot.lane.b32.xlu0 %v606, 72
        %v626 = vpop.permute.xlu0 %625
        %627 = vrot.lane.b32.xlu0 %v611, 72
        %v628 = vpop.permute.xlu0 %627
        %vm631 = vcmask 654944
        %632 = vst.msk [vmem:[%s201] sm:$0xff] %vm631, %v626
        %633 = vst.msk [vmem:[%s201 + $0x8] sm:$0xff] %vm631, %v628
        %v634 = vld [vmem:[%s175] sm:$0xff]
        %v635 = vld [vmem:[%s175 + $0x8] sm:$0xff]
        %638 = vrot.lane.b32.xlu0 %v634, 112
        %v639 = vpop.permute.xlu0 %638
        %640 = vrot.lane.b32.xlu0 %v635, 112
        %v641 = vpop.permute.xlu0 %640
        %v642 = vsel %vm214, %v639, 0
        %v644 = vsel %vm214, %v641, 0
        %646 = vmatprep.subr.mxu0 0.0
        %647 = vmatpush1.msra.mxu0 0.0
        %648 = vmatprep.subr.mxu0 0.0
        %649 = vmatpush1.msra.mxu0 0.0
        %650 = vmatprep.subr.mxu0 0.0
        %651 = vmatpush1.msra.mxu0 0.0
        %652 = vmatprep.subr.mxu0 0.0
        %653 = vmatpush1.msra.mxu0 0.0
        %654 = vmatprep.subr.mxu0 0.0
        %655 = vmatpush1.msra.mxu0 0.0
        %656 = vmatprep.subr.mxu0 0.0
        %657 = vmatpush1.msra.mxu0 0.0
        %658 = vmatprep.subr.mxu0 0.0
        %659 = vmatpush1.msra.mxu0 0.0
        %660 = vmatprep.subr.mxu0 0.0
        %661 = vmatpush1.msra.mxu0 0.0
        %662 = vmatprep.subr.mxu0 0.0
        %663 = vmatpush1.msra.mxu0 0.0
        %664 = vmatprep.subr.mxu0 0.0
        %665 = vmatpush1.msra.mxu0 0.0
        %666 = vmatprep.subr.mxu0 0.0
        %667 = vmatpush1.msra.mxu0 0.0
        %668 = vmatprep.subr.mxu0 0.0
        %669 = vmatpush1.msra.mxu0 0.0
        %670 = vmatprep.subr.mxu0 0.0
        %671 = vmatpush1.msra.mxu0 0.0
        %672 = vmatprep.subr.mxu0 0.0
        %673 = vmatpush1.msra.mxu0 0.0
        %674 = vmatprep.subr.mxu0 0.0
        %675 = vmatpush1.msra.mxu0 0.0
        %676 = vmatprep.subr.mxu0 0.0
        %677 = vmatpush1.msra.mxu0 %v223
        %678 = vmatprep.subr.mxu0 0.0
        %679 = vmatpush2.msra.mxu0 0.0
        %680 = vmatprep.subr.mxu0 0.0
        %681 = vmatpush2.msra.mxu0 0.0
        %682 = vmatprep.subr.mxu0 0.0
        %683 = vmatpush2.msra.mxu0 0.0
        %684 = vmatprep.subr.mxu0 0.0
        %685 = vmatpush2.msra.mxu0 0.0
        %686 = vmatprep.subr.mxu0 0.0
        %687 = vmatpush2.msra.mxu0 0.0
        %688 = vmatprep.subr.mxu0 0.0
        %689 = vmatpush2.msra.mxu0 0.0
        %690 = vmatprep.subr.mxu0 0.0
        %691 = vmatpush2.msra.mxu0 0.0
        %692 = vmatprep.subr.mxu0 0.0
        %693 = vmatpush2.msra.mxu0 0.0
        %694 = vmatprep.subr.mxu0 0.0
        %695 = vmatpush2.msra.mxu0 0.0
        %696 = vmatprep.subr.mxu0 0.0
        %697 = vmatpush2.msra.mxu0 0.0
        %698 = vmatprep.subr.mxu0 0.0
        %699 = vmatpush2.msra.mxu0 0.0
        %700 = vmatprep.subr.mxu0 0.0
        %701 = vmatpush2.msra.mxu0 0.0
        %702 = vmatprep.subr.mxu0 0.0
        %703 = vmatpush2.msra.mxu0 0.0
        %704 = vmatprep.subr.mxu0 0.0
        %705 = vmatpush2.msra.mxu0 0.0
        %706 = vmatprep.subr.mxu0 0.0
        %707 = vmatpush2.msra.mxu0 0.0
        %708 = vmatprep.subr.mxu0 0.0
        %709 = vmatpush2.msra.mxu0 0.0
        %710 = vmatprep.mubr.f32.mxu0 0.0
        %711 = vmatmul.mubr.f32.gmra.mxu0 %v642
        %v712 = vpop.f32.mrf.mxu0
        %v713 = vadd.f32 %v212, %v712
        %v714 = vpop.f32.mrf.mxu0
        %715 = vmatprep.mubr.f32.mxu0 0.0
        %716 = vmatmul.mubr.f32.gmra.mxu0 %v644
        %v717 = vpop.f32.mrf.mxu0
        %v718 = vadd.f32 %v212, %v717
        %v719 = vpop.f32.mrf.mxu0
        %720 = vdwg.mxu0
        %723 = vrot.lane.b32.xlu0 %v713, 16
        %v724 = vpop.permute.xlu0 %723
        %725 = vrot.lane.b32.xlu0 %v718, 16
        %v726 = vpop.permute.xlu0 %725
        %vm729 = vcmask 162944
        %730 = vst.msk [vmem:[%s201] sm:$0xff] %vm729, %v724
        %731 = vst.msk [vmem:[%s201 + $0x8] sm:$0xff] %vm729, %v726
        %732 = vrot.lane.b32.xlu0 %v713, 76
        %v733 = vpop.permute.xlu0 %732
        %734 = vrot.lane.b32.xlu0 %v718, 76
        %v735 = vpop.permute.xlu0 %734
        %vm738 = vcmask 687744
        %739 = vst.msk [vmem:[%s201] sm:$0xff] %vm738, %v733
        %740 = vst.msk [vmem:[%s201 + $0x8] sm:$0xff] %vm738, %v735
        %v741 = vld [vmem:[%s175] sm:$0xff]
        %v742 = vld [vmem:[%s175 + $0x8] sm:$0xff]
        %745 = vrot.lane.b32.xlu0 %v741, 108
        %v746 = vpop.permute.xlu0 %745
        %747 = vrot.lane.b32.xlu0 %v742, 108
        %v748 = vpop.permute.xlu0 %747
        %v749 = vsel %vm214, %v746, 0
        %v751 = vsel %vm214, %v748, 0
        %753 = vmatprep.subr.mxu0 0.0
        %754 = vmatpush1.msra.mxu0 0.0
        %755 = vmatprep.subr.mxu0 0.0
        %756 = vmatpush1.msra.mxu0 0.0
        %757 = vmatprep.subr.mxu0 0.0
        %758 = vmatpush1.msra.mxu0 0.0
        %759 = vmatprep.subr.mxu0 0.0
        %760 = vmatpush1.msra.mxu0 0.0
        %761 = vmatprep.subr.mxu0 0.0
        %762 = vmatpush1.msra.mxu0 0.0
        %763 = vmatprep.subr.mxu0 0.0
        %764 = vmatpush1.msra.mxu0 0.0
        %765 = vmatprep.subr.mxu0 0.0
        %766 = vmatpush1.msra.mxu0 0.0
        %767 = vmatprep.subr.mxu0 0.0
        %768 = vmatpush1.msra.mxu0 0.0
        %769 = vmatprep.subr.mxu0 0.0
        %770 = vmatpush1.msra.mxu0 0.0
        %771 = vmatprep.subr.mxu0 0.0
        %772 = vmatpush1.msra.mxu0 0.0
        %773 = vmatprep.subr.mxu0 0.0
        %774 = vmatpush1.msra.mxu0 0.0
        %775 = vmatprep.subr.mxu0 0.0
        %776 = vmatpush1.msra.mxu0 0.0
        %777 = vmatprep.subr.mxu0 0.0
        %778 = vmatpush1.msra.mxu0 0.0
        %779 = vmatprep.subr.mxu0 0.0
        %780 = vmatpush1.msra.mxu0 0.0
        %781 = vmatprep.subr.mxu0 0.0
        %782 = vmatpush1.msra.mxu0 0.0
        %783 = vmatprep.subr.mxu0 0.0
        %784 = vmatpush1.msra.mxu0 %v223
        %785 = vmatprep.subr.mxu0 0.0
        %786 = vmatpush2.msra.mxu0 0.0
        %787 = vmatprep.subr.mxu0 0.0
        %788 = vmatpush2.msra.mxu0 0.0
        %789 = vmatprep.subr.mxu0 0.0
        %790 = vmatpush2.msra.mxu0 0.0
        %791 = vmatprep.subr.mxu0 0.0
        %792 = vmatpush2.msra.mxu0 0.0
        %793 = vmatprep.subr.mxu0 0.0
        %794 = vmatpush2.msra.mxu0 0.0
        %795 = vmatprep.subr.mxu0 0.0
        %796 = vmatpush2.msra.mxu0 0.0
        %797 = vmatprep.subr.mxu0 0.0
        %798 = vmatpush2.msra.mxu0 0.0
        %799 = vmatprep.subr.mxu0 0.0
        %800 = vmatpush2.msra.mxu0 0.0
        %801 = vmatprep.subr.mxu0 0.0
        %802 = vmatpush2.msra.mxu0 0.0
        %803 = vmatprep.subr.mxu0 0.0
        %804 = vmatpush2.msra.mxu0 0.0
        %805 = vmatprep.subr.mxu0 0.0
        %806 = vmatpush2.msra.mxu0 0.0
        %807 = vmatprep.subr.mxu0 0.0
        %808 = vmatpush2.msra.mxu0 0.0
        %809 = vmatprep.subr.mxu0 0.0
        %810 = vmatpush2.msra.mxu0 0.0
        %811 = vmatprep.subr.mxu0 0.0
        %812 = vmatpush2.msra.mxu0 0.0
        %813 = vmatprep.subr.mxu0 0.0
        %814 = vmatpush2.msra.mxu0 0.0
        %815 = vmatprep.subr.mxu0 0.0
        %816 = vmatpush2.msra.mxu0 0.0
        %817 = vmatprep.mubr.f32.mxu0 0.0
        %818 = vmatmul.mubr.f32.gmra.mxu0 %v749
        %v819 = vpop.f32.mrf.mxu0
        %v820 = vadd.f32 %v212, %v819
        %v821 = vpop.f32.mrf.mxu0
        %822 = vmatprep.mubr.f32.mxu0 0.0
        %823 = vmatmul.mubr.f32.gmra.mxu0 %v751
        %v824 = vpop.f32.mrf.mxu0
        %v825 = vadd.f32 %v212, %v824
        %v826 = vpop.f32.mrf.mxu0
        %827 = vdwg.mxu0
        %830 = vrot.lane.b32.xlu0 %v820, 20
        %v831 = vpop.permute.xlu0 %830
        %832 = vrot.lane.b32.xlu0 %v825, 20
        %v833 = vpop.permute.xlu0 %832
        %vm836 = vcmask 195744
        %837 = vst.msk [vmem:[%s201] sm:$0xff] %vm836, %v831
        %838 = vst.msk [vmem:[%s201 + $0x8] sm:$0xff] %vm836, %v833
        %839 = vrot.lane.b32.xlu0 %v820, 80
        %v840 = vpop.permute.xlu0 %839
        %841 = vrot.lane.b32.xlu0 %v825, 80
        %v842 = vpop.permute.xlu0 %841
        %vm845 = vcmask 720544
        %846 = vst.msk [vmem:[%s201] sm:$0xff] %vm845, %v840
        %847 = vst.msk [vmem:[%s201 + $0x8] sm:$0xff] %vm845, %v842
        %v848 = vld [vmem:[%s175] sm:$0xff]
        %v849 = vld [vmem:[%s175 + $0x8] sm:$0xff]
        %852 = vrot.lane.b32.xlu0 %v848, 104
        %v853 = vpop.permute.xlu0 %852
        %854 = vrot.lane.b32.xlu0 %v849, 104
        %v855 = vpop.permute.xlu0 %854
        %v856 = vsel %vm214, %v853, 0
        %v858 = vsel %vm214, %v855, 0
        %860 = vmatprep.subr.mxu0 0.0
        %861 = vmatpush1.msra.mxu0 0.0
        %862 = vmatprep.subr.mxu0 0.0
        %863 = vmatpush1.msra.mxu0 0.0
        %864 = vmatprep.subr.mxu0 0.0
        %865 = vmatpush1.msra.mxu0 0.0
        %866 = vmatprep.subr.mxu0 0.0
        %867 = vmatpush1.msra.mxu0 0.0
        %868 = vmatprep.subr.mxu0 0.0
        %869 = vmatpush1.msra.mxu0 0.0
        %870 = vmatprep.subr.mxu0 0.0
        %871 = vmatpush1.msra.mxu0 0.0
        %872 = vmatprep.subr.mxu0 0.0
        %873 = vmatpush1.msra.mxu0 0.0
        %874 = vmatprep.subr.mxu0 0.0
        %875 = vmatpush1.msra.mxu0 0.0
        %876 = vmatprep.subr.mxu0 0.0
        %877 = vmatpush1.msra.mxu0 0.0
        %878 = vmatprep.subr.mxu0 0.0
        %879 = vmatpush1.msra.mxu0 0.0
        %880 = vmatprep.subr.mxu0 0.0
        %881 = vmatpush1.msra.mxu0 0.0
        %882 = vmatprep.subr.mxu0 0.0
        %883 = vmatpush1.msra.mxu0 0.0
        %884 = vmatprep.subr.mxu0 0.0
        %885 = vmatpush1.msra.mxu0 0.0
        %886 = vmatprep.subr.mxu0 0.0
        %887 = vmatpush1.msra.mxu0 0.0
        %888 = vmatprep.subr.mxu0 0.0
        %889 = vmatpush1.msra.mxu0 0.0
        %890 = vmatprep.subr.mxu0 0.0
        %891 = vmatpush1.msra.mxu0 %v223
        %892 = vmatprep.subr.mxu0 0.0
        %893 = vmatpush2.msra.mxu0 0.0
        %894 = vmatprep.subr.mxu0 0.0
        %895 = vmatpush2.msra.mxu0 0.0
        %896 = vmatprep.subr.mxu0 0.0
        %897 = vmatpush2.msra.mxu0 0.0
        %898 = vmatprep.subr.mxu0 0.0
        %899 = vmatpush2.msra.mxu0 0.0
        %900 = vmatprep.subr.mxu0 0.0
        %901 = vmatpush2.msra.mxu0 0.0
        %902 = vmatprep.subr.mxu0 0.0
        %903 = vmatpush2.msra.mxu0 0.0
        %904 = vmatprep.subr.mxu0 0.0
        %905 = vmatpush2.msra.mxu0 0.0
        %906 = vmatprep.subr.mxu0 0.0
        %907 = vmatpush2.msra.mxu0 0.0
        %908 = vmatprep.subr.mxu0 0.0
        %909 = vmatpush2.msra.mxu0 0.0
        %910 = vmatprep.subr.mxu0 0.0
        %911 = vmatpush2.msra.mxu0 0.0
        %912 = vmatprep.subr.mxu0 0.0
        %913 = vmatpush2.msra.mxu0 0.0
        %914 = vmatprep.subr.mxu0 0.0
        %915 = vmatpush2.msra.mxu0 0.0
        %916 = vmatprep.subr.mxu0 0.0
        %917 = vmatpush2.msra.mxu0 0.0
        %918 = vmatprep.subr.mxu0 0.0
        %919 = vmatpush2.msra.mxu0 0.0
        %920 = vmatprep.subr.mxu0 0.0
        %921 = vmatpush2.msra.mxu0 0.0
        %922 = vmatprep.subr.mxu0 0.0
        %923 = vmatpush2.msra.mxu0 0.0
        %924 = vmatprep.mubr.f32.mxu0 0.0
        %925 = vmatmul.mubr.f32.gmra.mxu0 %v856
        %v926 = vpop.f32.mrf.mxu0
        %v927 = vadd.f32 %v212, %v926
        %v928 = vpop.f32.mrf.mxu0
        %929 = vmatprep.mubr.f32.mxu0 0.0
        %930 = vmatmul.mubr.f32.gmra.mxu0 %v858
        %v931 = vpop.f32.mrf.mxu0
        %v932 = vadd.f32 %v212, %v931
        %v933 = vpop.f32.mrf.mxu0
        %934 = vdwg.mxu0
        %937 = vrot.lane.b32.xlu0 %v927, 24
        %v938 = vpop.permute.xlu0 %937
        %939 = vrot.lane.b32.xlu0 %v932, 24
        %v940 = vpop.permute.xlu0 %939
        %vm943 = vcmask 228544
        %944 = vst.msk [vmem:[%s201] sm:$0xff] %vm943, %v938
        %945 = vst.msk [vmem:[%s201 + $0x8] sm:$0xff] %vm943, %v940
        %946 = vrot.lane.b32.xlu0 %v927, 84
        %v947 = vpop.permute.xlu0 %946
        %948 = vrot.lane.b32.xlu0 %v932, 84
        %v949 = vpop.permute.xlu0 %948
        %vm952 = vcmask 753344
        %953 = vst.msk [vmem:[%s201] sm:$0xff] %vm952, %v947
        %954 = vst.msk [vmem:[%s201 + $0x8] sm:$0xff] %vm952, %v949
        %v955 = vld [vmem:[%s175] sm:$0xff]
        %v956 = vld [vmem:[%s175 + $0x8] sm:$0xff]
        %959 = vrot.lane.b32.xlu0 %v955, 100
        %v960 = vpop.permute.xlu0 %959
        %961 = vrot.lane.b32.xlu0 %v956, 100
        %v962 = vpop.permute.xlu0 %961
        %v963 = vsel %vm214, %v960, 0
        %v965 = vsel %vm214, %v962, 0
        %967 = vmatprep.subr.mxu0 0.0
        %968 = vmatpush1.msra.mxu0 0.0
        %969 = vmatprep.subr.mxu0 0.0
        %970 = vmatpush1.msra.mxu0 0.0
        %971 = vmatprep.subr.mxu0 0.0
        %972 = vmatpush1.msra.mxu0 0.0
        %973 = vmatprep.subr.mxu0 0.0
        %974 = vmatpush1.msra.mxu0 0.0
        %975 = vmatprep.subr.mxu0 0.0
        %976 = vmatpush1.msra.mxu0 0.0
        %977 = vmatprep.subr.mxu0 0.0
        %978 = vmatpush1.msra.mxu0 0.0
        %979 = vmatprep.subr.mxu0 0.0
        %980 = vmatpush1.msra.mxu0 0.0
        %981 = vmatprep.subr.mxu0 0.0
        %982 = vmatpush1.msra.mxu0 0.0
        %983 = vmatprep.subr.mxu0 0.0
        %984 = vmatpush1.msra.mxu0 0.0
        %985 = vmatprep.subr.mxu0 0.0
        %986 = vmatpush1.msra.mxu0 0.0
        %987 = vmatprep.subr.mxu0 0.0
        %988 = vmatpush1.msra.mxu0 0.0
        %989 = vmatprep.subr.mxu0 0.0
        %990 = vmatpush1.msra.mxu0 0.0
        %991 = vmatprep.subr.mxu0 0.0
        %992 = vmatpush1.msra.mxu0 0.0
        %993 = vmatprep.subr.mxu0 0.0
        %994 = vmatpush1.msra.mxu0 0.0
        %995 = vmatprep.subr.mxu0 0.0
        %996 = vmatpush1.msra.mxu0 0.0
        %997 = vmatprep.subr.mxu0 0.0
        %998 = vmatpush1.msra.mxu0 %v223
        %999 = vmatprep.subr.mxu0 0.0
        %1000 = vmatpush2.msra.mxu0 0.0
        %1001 = vmatprep.subr.mxu0 0.0
        %1002 = vmatpush2.msra.mxu0 0.0
        %1003 = vmatprep.subr.mxu0 0.0
        %1004 = vmatpush2.msra.mxu0 0.0
        %1005 = vmatprep.subr.mxu0 0.0
        %1006 = vmatpush2.msra.mxu0 0.0
        %1007 = vmatprep.subr.mxu0 0.0
        %1008 = vmatpush2.msra.mxu0 0.0
        %1009 = vmatprep.subr.mxu0 0.0
        %1010 = vmatpush2.msra.mxu0 0.0
        %1011 = vmatprep.subr.mxu0 0.0
        %1012 = vmatpush2.msra.mxu0 0.0
        %1013 = vmatprep.subr.mxu0 0.0
        %1014 = vmatpush2.msra.mxu0 0.0
        %1015 = vmatprep.subr.mxu0 0.0
        %1016 = vmatpush2.msra.mxu0 0.0
        %1017 = vmatprep.subr.mxu0 0.0
        %1018 = vmatpush2.msra.mxu0 0.0
        %1019 = vmatprep.subr.mxu0 0.0
        %1020 = vmatpush2.msra.mxu0 0.0
        %1021 = vmatprep.subr.mxu0 0.0
        %1022 = vmatpush2.msra.mxu0 0.0
        %1023 = vmatprep.subr.mxu0 0.0
        %1024 = vmatpush2.msra.mxu0 0.0
        %1025 = vmatprep.subr.mxu0 0.0
        %1026 = vmatpush2.msra.mxu0 0.0
        %1027 = vmatprep.subr.mxu0 0.0
        %1028 = vmatpush2.msra.mxu0 0.0
        %1029 = vmatprep.subr.mxu0 0.0
        %1030 = vmatpush2.msra.mxu0 0.0
        %1031 = vmatprep.mubr.f32.mxu0 0.0
        %1032 = vmatmul.mubr.f32.gmra.mxu0 %v963
        %v1033 = vpop.f32.mrf.mxu0
        %v1034 = vadd.f32 %v212, %v1033
        %v1035 = vpop.f32.mrf.mxu0
        %1036 = vmatprep.mubr.f32.mxu0 0.0
        %1037 = vmatmul.mubr.f32.gmra.mxu0 %v965
        %v1038 = vpop.f32.mrf.mxu0
        %v1039 = vadd.f32 %v212, %v1038
        %v1040 = vpop.f32.mrf.mxu0
        %1041 = vdwg.mxu0
        %1044 = vrot.lane.b32.xlu0 %v1034, 28
        %v1045 = vpop.permute.xlu0 %1044
        %1046 = vrot.lane.b32.xlu0 %v1039, 28
        %v1047 = vpop.permute.xlu0 %1046
        %vm1050 = vcmask 261344
        %1051 = vst.msk [vmem:[%s201] sm:$0xff] %vm1050, %v1045
        %1052 = vst.msk [vmem:[%s201 + $0x8] sm:$0xff] %vm1050, %v1047
        %1053 = vrot.lane.b32.xlu0 %v1034, 88
        %v1054 = vpop.permute.xlu0 %1053
        %1055 = vrot.lane.b32.xlu0 %v1039, 88
        %v1056 = vpop.permute.xlu0 %1055
        %vm1059 = vcmask 786144
        %1060 = vst.msk [vmem:[%s201] sm:$0xff] %vm1059, %v1054
        %1061 = vst.msk [vmem:[%s201 + $0x8] sm:$0xff] %vm1059, %v1056
        %v1062 = vld [vmem:[%s175] sm:$0xff]
        %v1063 = vld [vmem:[%s175 + $0x8] sm:$0xff]
        %1066 = vrot.lane.b32.xlu0 %v1062, 96
        %v1067 = vpop.permute.xlu0 %1066
        %1068 = vrot.lane.b32.xlu0 %v1063, 96
        %v1069 = vpop.permute.xlu0 %1068
        %v1070 = vsel %vm214, %v1067, 0
        %v1072 = vsel %vm214, %v1069, 0
        %1074 = vmatprep.subr.mxu0 0.0
        %1075 = vmatpush1.msra.mxu0 0.0
        %1076 = vmatprep.subr.mxu0 0.0
        %1077 = vmatpush1.msra.mxu0 0.0
        %1078 = vmatprep.subr.mxu0 0.0
        %1079 = vmatpush1.msra.mxu0 0.0
        %1080 = vmatprep.subr.mxu0 0.0
        %1081 = vmatpush1.msra.mxu0 0.0
        %1082 = vmatprep.subr.mxu0 0.0
        %1083 = vmatpush1.msra.mxu0 0.0
        %1084 = vmatprep.subr.mxu0 0.0
        %1085 = vmatpush1.msra.mxu0 0.0
        %1086 = vmatprep.subr.mxu0 0.0
        %1087 = vmatpush1.msra.mxu0 0.0
        %1088 = vmatprep.subr.mxu0 0.0
        %1089 = vmatpush1.msra.mxu0 0.0
        %1090 = vmatprep.subr.mxu0 0.0
        %1091 = vmatpush1.msra.mxu0 0.0
        %1092 = vmatprep.subr.mxu0 0.0
        %1093 = vmatpush1.msra.mxu0 0.0
        %1094 = vmatprep.subr.mxu0 0.0
        %1095 = vmatpush1.msra.mxu0 0.0
        %1096 = vmatprep.subr.mxu0 0.0
        %1097 = vmatpush1.msra.mxu0 0.0
        %1098 = vmatprep.subr.mxu0 0.0
        %1099 = vmatpush1.msra.mxu0 0.0
        %1100 = vmatprep.subr.mxu0 0.0
        %1101 = vmatpush1.msra.mxu0 0.0
        %1102 = vmatprep.subr.mxu0 0.0
        %1103 = vmatpush1.msra.mxu0 0.0
        %1104 = vmatprep.subr.mxu0 0.0
        %1105 = vmatpush1.msra.mxu0 %v223
        %1106 = vmatprep.subr.mxu0 0.0
        %1107 = vmatpush2.msra.mxu0 0.0
        %1108 = vmatprep.subr.mxu0 0.0
        %1109 = vmatpush2.msra.mxu0 0.0
        %1110 = vmatprep.subr.mxu0 0.0
        %1111 = vmatpush2.msra.mxu0 0.0
        %1112 = vmatprep.subr.mxu0 0.0
        %1113 = vmatpush2.msra.mxu0 0.0
        %1114 = vmatprep.subr.mxu0 0.0
        %1115 = vmatpush2.msra.mxu0 0.0
        %1116 = vmatprep.subr.mxu0 0.0
        %1117 = vmatpush2.msra.mxu0 0.0
        %1118 = vmatprep.subr.mxu0 0.0
        %1119 = vmatpush2.msra.mxu0 0.0
        %1120 = vmatprep.subr.mxu0 0.0
        %1121 = vmatpush2.msra.mxu0 0.0
        %1122 = vmatprep.subr.mxu0 0.0
        %1123 = vmatpush2.msra.mxu0 0.0
        %1124 = vmatprep.subr.mxu0 0.0
        %1125 = vmatpush2.msra.mxu0 0.0
        %1126 = vmatprep.subr.mxu0 0.0
        %1127 = vmatpush2.msra.mxu0 0.0
        %1128 = vmatprep.subr.mxu0 0.0
        %1129 = vmatpush2.msra.mxu0 0.0
        %1130 = vmatprep.subr.mxu0 0.0
        %1131 = vmatpush2.msra.mxu0 0.0
        %1132 = vmatprep.subr.mxu0 0.0
        %1133 = vmatpush2.msra.mxu0 0.0
        %1134 = vmatprep.subr.mxu0 0.0
        %1135 = vmatpush2.msra.mxu0 0.0
        %1136 = vmatprep.subr.mxu0 0.0
        %1137 = vmatpush2.msra.mxu0 0.0
        %1138 = vmatprep.mubr.f32.mxu0 0.0
        %1139 = vmatmul.mubr.f32.gmra.mxu0 %v1070
        %v1140 = vpop.f32.mrf.mxu0
        %v1141 = vadd.f32 %v212, %v1140
        %v1142 = vpop.f32.mrf.mxu0
        %1143 = vmatprep.mubr.f32.mxu0 0.0
        %1144 = vmatmul.mubr.f32.gmra.mxu0 %v1072
        %v1145 = vpop.f32.mrf.mxu0
        %v1146 = vadd.f32 %v212, %v1145
        %v1147 = vpop.f32.mrf.mxu0
        %1148 = vdwg.mxu0
        %1151 = vrot.lane.b32.xlu0 %v1141, 32
        %v1152 = vpop.permute.xlu0 %1151
        %1153 = vrot.lane.b32.xlu0 %v1146, 32
        %v1154 = vpop.permute.xlu0 %1153
        %vm1157 = vcmask 294144
        %1158 = vst.msk [vmem:[%s201] sm:$0xff] %vm1157, %v1152
        %1159 = vst.msk [vmem:[%s201 + $0x8] sm:$0xff] %vm1157, %v1154
        %1160 = vrot.lane.b32.xlu0 %v1141, 92
        %v1161 = vpop.permute.xlu0 %1160
        %1162 = vrot.lane.b32.xlu0 %v1146, 92
        %v1163 = vpop.permute.xlu0 %1162
        %vm1166 = vcmask 818944
        %1167 = vst.msk [vmem:[%s201] sm:$0xff] %vm1166, %v1161
        %1168 = vst.msk [vmem:[%s201 + $0x8] sm:$0xff] %vm1166, %v1163
        %v1169 = vld [vmem:[%s175] sm:$0xff]
        %v1170 = vld [vmem:[%s175 + $0x8] sm:$0xff]
        %1173 = vrot.lane.b32.xlu0 %v1169, 92
        %v1174 = vpop.permute.xlu0 %1173
        %1175 = vrot.lane.b32.xlu0 %v1170, 92
        %v1176 = vpop.permute.xlu0 %1175
        %v1177 = vsel %vm214, %v1174, 0
        %v1179 = vsel %vm214, %v1176, 0
        %1181 = vmatprep.subr.mxu0 0.0
        %1182 = vmatpush1.msra.mxu0 0.0
        %1183 = vmatprep.subr.mxu0 0.0
        %1184 = vmatpush1.msra.mxu0 0.0
        %1185 = vmatprep.subr.mxu0 0.0
        %1186 = vmatpush1.msra.mxu0 0.0
        %1187 = vmatprep.subr.mxu0 0.0
        %1188 = vmatpush1.msra.mxu0 0.0
        %1189 = vmatprep.subr.mxu0 0.0
        %1190 = vmatpush1.msra.mxu0 0.0
        %1191 = vmatprep.subr.mxu0 0.0
        %1192 = vmatpush1.msra.mxu0 0.0
        %1193 = vmatprep.subr.mxu0 0.0
        %1194 = vmatpush1.msra.mxu0 0.0
        %1195 = vmatprep.subr.mxu0 0.0
        %1196 = vmatpush1.msra.mxu0 0.0
        %1197 = vmatprep.subr.mxu0 0.0
        %1198 = vmatpush1.msra.mxu0 0.0
        %1199 = vmatprep.subr.mxu0 0.0
        %1200 = vmatpush1.msra.mxu0 0.0
        %1201 = vmatprep.subr.mxu0 0.0
        %1202 = vmatpush1.msra.mxu0 0.0
        %1203 = vmatprep.subr.mxu0 0.0
        %1204 = vmatpush1.msra.mxu0 0.0
        %1205 = vmatprep.subr.mxu0 0.0
        %1206 = vmatpush1.msra.mxu0 0.0
        %1207 = vmatprep.subr.mxu0 0.0
        %1208 = vmatpush1.msra.mxu0 0.0
        %1209 = vmatprep.subr.mxu0 0.0
        %1210 = vmatpush1.msra.mxu0 0.0
        %1211 = vmatprep.subr.mxu0 0.0
        %1212 = vmatpush1.msra.mxu0 %v223
        %1213 = vmatprep.subr.mxu0 0.0
        %1214 = vmatpush2.msra.mxu0 0.0
        %1215 = vmatprep.subr.mxu0 0.0
        %1216 = vmatpush2.msra.mxu0 0.0
        %1217 = vmatprep.subr.mxu0 0.0
        %1218 = vmatpush2.msra.mxu0 0.0
        %1219 = vmatprep.subr.mxu0 0.0
        %1220 = vmatpush2.msra.mxu0 0.0
        %1221 = vmatprep.subr.mxu0 0.0
        %1222 = vmatpush2.msra.mxu0 0.0
        %1223 = vmatprep.subr.mxu0 0.0
        %1224 = vmatpush2.msra.mxu0 0.0
        %1225 = vmatprep.subr.mxu0 0.0
        %1226 = vmatpush2.msra.mxu0 0.0
        %1227 = vmatprep.subr.mxu0 0.0
        %1228 = vmatpush2.msra.mxu0 0.0
        %1229 = vmatprep.subr.mxu0 0.0
        %1230 = vmatpush2.msra.mxu0 0.0
        %1231 = vmatprep.subr.mxu0 0.0
        %1232 = vmatpush2.msra.mxu0 0.0
        %1233 = vmatprep.subr.mxu0 0.0
        %1234 = vmatpush2.msra.mxu0 0.0
        %1235 = vmatprep.subr.mxu0 0.0
        %1236 = vmatpush2.msra.mxu0 0.0
        %1237 = vmatprep.subr.mxu0 0.0
        %1238 = vmatpush2.msra.mxu0 0.0
        %1239 = vmatprep.subr.mxu0 0.0
        %1240 = vmatpush2.msra.mxu0 0.0
        %1241 = vmatprep.subr.mxu0 0.0
        %1242 = vmatpush2.msra.mxu0 0.0
        %1243 = vmatprep.subr.mxu0 0.0
        %1244 = vmatpush2.msra.mxu0 0.0
        %1245 = vmatprep.mubr.f32.mxu0 0.0
        %1246 = vmatmul.mubr.f32.gmra.mxu0 %v1177
        %v1247 = vpop.f32.mrf.mxu0
        %v1248 = vadd.f32 %v212, %v1247
        %v1249 = vpop.f32.mrf.mxu0
        %1250 = vmatprep.mubr.f32.mxu0 0.0
        %1251 = vmatmul.mubr.f32.gmra.mxu0 %v1179
        %v1252 = vpop.f32.mrf.mxu0
        %v1253 = vadd.f32 %v212, %v1252
        %v1254 = vpop.f32.mrf.mxu0
        %1255 = vdwg.mxu0
        %1258 = vrot.lane.b32.xlu0 %v1248, 36
        %v1259 = vpop.permute.xlu0 %1258
        %1260 = vrot.lane.b32.xlu0 %v1253, 36
        %v1261 = vpop.permute.xlu0 %1260
        %vm1264 = vcmask 326944
        %1265 = vst.msk [vmem:[%s201] sm:$0xff] %vm1264, %v1259
        %1266 = vst.msk [vmem:[%s201 + $0x8] sm:$0xff] %vm1264, %v1261
        %1267 = vrot.lane.b32.xlu0 %v1248, 96
        %v1268 = vpop.permute.xlu0 %1267
        %1269 = vrot.lane.b32.xlu0 %v1253, 96
        %v1270 = vpop.permute.xlu0 %1269
        %vm1273 = vcmask 851744
        %1274 = vst.msk [vmem:[%s201] sm:$0xff] %vm1273, %v1268
        %1275 = vst.msk [vmem:[%s201 + $0x8] sm:$0xff] %vm1273, %v1270
        %v1276 = vld [vmem:[%s175] sm:$0xff]
        %v1277 = vld [vmem:[%s175 + $0x8] sm:$0xff]
        %1280 = vrot.lane.b32.xlu0 %v1276, 88
        %v1281 = vpop.permute.xlu0 %1280
        %1282 = vrot.lane.b32.xlu0 %v1277, 88
        %v1283 = vpop.permute.xlu0 %1282
        %v1284 = vsel %vm214, %v1281, 0
        %v1286 = vsel %vm214, %v1283, 0
        %1288 = vmatprep.subr.mxu0 0.0
        %1289 = vmatpush1.msra.mxu0 0.0
        %1290 = vmatprep.subr.mxu0 0.0
        %1291 = vmatpush1.msra.mxu0 0.0
        %1292 = vmatprep.subr.mxu0 0.0
        %1293 = vmatpush1.msra.mxu0 0.0
        %1294 = vmatprep.subr.mxu0 0.0
        %1295 = vmatpush1.msra.mxu0 0.0
        %1296 = vmatprep.subr.mxu0 0.0
        %1297 = vmatpush1.msra.mxu0 0.0
        %1298 = vmatprep.subr.mxu0 0.0
        %1299 = vmatpush1.msra.mxu0 0.0
        %1300 = vmatprep.subr.mxu0 0.0
        %1301 = vmatpush1.msra.mxu0 0.0
        %1302 = vmatprep.subr.mxu0 0.0
        %1303 = vmatpush1.msra.mxu0 0.0
        %1304 = vmatprep.subr.mxu0 0.0
        %1305 = vmatpush1.msra.mxu0 0.0
        %1306 = vmatprep.subr.mxu0 0.0
        %1307 = vmatpush1.msra.mxu0 0.0
        %1308 = vmatprep.subr.mxu0 0.0
        %1309 = vmatpush1.msra.mxu0 0.0
        %1310 = vmatprep.subr.mxu0 0.0
        %1311 = vmatpush1.msra.mxu0 0.0
        %1312 = vmatprep.subr.mxu0 0.0
        %1313 = vmatpush1.msra.mxu0 0.0
        %1314 = vmatprep.subr.mxu0 0.0
        %1315 = vmatpush1.msra.mxu0 0.0
        %1316 = vmatprep.subr.mxu0 0.0
        %1317 = vmatpush1.msra.mxu0 0.0
        %1318 = vmatprep.subr.mxu0 0.0
        %1319 = vmatpush1.msra.mxu0 %v223
        %1320 = vmatprep.subr.mxu0 0.0
        %1321 = vmatpush2.msra.mxu0 0.0
        %1322 = vmatprep.subr.mxu0 0.0
        %1323 = vmatpush2.msra.mxu0 0.0
        %1324 = vmatprep.subr.mxu0 0.0
        %1325 = vmatpush2.msra.mxu0 0.0
        %1326 = vmatprep.subr.mxu0 0.0
        %1327 = vmatpush2.msra.mxu0 0.0
        %1328 = vmatprep.subr.mxu0 0.0
        %1329 = vmatpush2.msra.mxu0 0.0
        %1330 = vmatprep.subr.mxu0 0.0
        %1331 = vmatpush2.msra.mxu0 0.0
        %1332 = vmatprep.subr.mxu0 0.0
        %1333 = vmatpush2.msra.mxu0 0.0
        %1334 = vmatprep.subr.mxu0 0.0
        %1335 = vmatpush2.msra.mxu0 0.0
        %1336 = vmatprep.subr.mxu0 0.0
        %1337 = vmatpush2.msra.mxu0 0.0
        %1338 = vmatprep.subr.mxu0 0.0
        %1339 = vmatpush2.msra.mxu0 0.0
        %1340 = vmatprep.subr.mxu0 0.0
        %1341 = vmatpush2.msra.mxu0 0.0
        %1342 = vmatprep.subr.mxu0 0.0
        %1343 = vmatpush2.msra.mxu0 0.0
        %1344 = vmatprep.subr.mxu0 0.0
        %1345 = vmatpush2.msra.mxu0 0.0
        %1346 = vmatprep.subr.mxu0 0.0
        %1347 = vmatpush2.msra.mxu0 0.0
        %1348 = vmatprep.subr.mxu0 0.0
        %1349 = vmatpush2.msra.mxu0 0.0
        %1350 = vmatprep.subr.mxu0 0.0
        %1351 = vmatpush2.msra.mxu0 0.0
        %1352 = vmatprep.mubr.f32.mxu0 0.0
        %1353 = vmatmul.mubr.f32.gmra.mxu0 %v1284
        %v1354 = vpop.f32.mrf.mxu0
        %v1355 = vadd.f32 %v212, %v1354
        %v1356 = vpop.f32.mrf.mxu0
        %1357 = vmatprep.mubr.f32.mxu0 0.0
        %1358 = vmatmul.mubr.f32.gmra.mxu0 %v1286
        %v1359 = vpop.f32.mrf.mxu0
        %v1360 = vadd.f32 %v212, %v1359
        %v1361 = vpop.f32.mrf.mxu0
        %1362 = vdwg.mxu0
        %1365 = vrot.lane.b32.xlu0 %v1355, 40
        %v1366 = vpop.permute.xlu0 %1365
        %1367 = vrot.lane.b32.xlu0 %v1360, 40
        %v1368 = vpop.permute.xlu0 %1367
        %vm1371 = vcmask 359744
        %1372 = vst.msk [vmem:[%s201] sm:$0xff] %vm1371, %v1366
        %1373 = vst.msk [vmem:[%s201 + $0x8] sm:$0xff] %vm1371, %v1368
        %1374 = vrot.lane.b32.xlu0 %v1355, 100
        %v1375 = vpop.permute.xlu0 %1374
        %1376 = vrot.lane.b32.xlu0 %v1360, 100
        %v1377 = vpop.permute.xlu0 %1376
        %vm1380 = vcmask 884544
        %1381 = vst.msk [vmem:[%s201] sm:$0xff] %vm1380, %v1375
        %1382 = vst.msk [vmem:[%s201 + $0x8] sm:$0xff] %vm1380, %v1377
        %v1383 = vld [vmem:[%s175] sm:$0xff]
        %v1384 = vld [vmem:[%s175 + $0x8] sm:$0xff]
        %1387 = vrot.lane.b32.xlu0 %v1383, 84
        %v1388 = vpop.permute.xlu0 %1387
        %1389 = vrot.lane.b32.xlu0 %v1384, 84
        %v1390 = vpop.permute.xlu0 %1389
        %v1391 = vsel %vm214, %v1388, 0
        %v1393 = vsel %vm214, %v1390, 0
        %1395 = vmatprep.subr.mxu0 0.0
        %1396 = vmatpush1.msra.mxu0 0.0
        %1397 = vmatprep.subr.mxu0 0.0
        %1398 = vmatpush1.msra.mxu0 0.0
        %1399 = vmatprep.subr.mxu0 0.0
        %1400 = vmatpush1.msra.mxu0 0.0
        %1401 = vmatprep.subr.mxu0 0.0
        %1402 = vmatpush1.msra.mxu0 0.0
        %1403 = vmatprep.subr.mxu0 0.0
        %1404 = vmatpush1.msra.mxu0 0.0
        %1405 = vmatprep.subr.mxu0 0.0
        %1406 = vmatpush1.msra.mxu0 0.0
        %1407 = vmatprep.subr.mxu0 0.0
        %1408 = vmatpush1.msra.mxu0 0.0
        %1409 = vmatprep.subr.mxu0 0.0
        %1410 = vmatpush1.msra.mxu0 0.0
        %1411 = vmatprep.subr.mxu0 0.0
        %1412 = vmatpush1.msra.mxu0 0.0
        %1413 = vmatprep.subr.mxu0 0.0
        %1414 = vmatpush1.msra.mxu0 0.0
        %1415 = vmatprep.subr.mxu0 0.0
        %1416 = vmatpush1.msra.mxu0 0.0
        %1417 = vmatprep.subr.mxu0 0.0
        %1418 = vmatpush1.msra.mxu0 0.0
        %1419 = vmatprep.subr.mxu0 0.0
        %1420 = vmatpush1.msra.mxu0 0.0
        %1421 = vmatprep.subr.mxu0 0.0
        %1422 = vmatpush1.msra.mxu0 0.0
        %1423 = vmatprep.subr.mxu0 0.0
        %1424 = vmatpush1.msra.mxu0 0.0
        %1425 = vmatprep.subr.mxu0 0.0
        %1426 = vmatpush1.msra.mxu0 %v223
        %1427 = vmatprep.subr.mxu0 0.0
        %1428 = vmatpush2.msra.mxu0 0.0
        %1429 = vmatprep.subr.mxu0 0.0
        %1430 = vmatpush2.msra.mxu0 0.0
        %1431 = vmatprep.subr.mxu0 0.0
        %1432 = vmatpush2.msra.mxu0 0.0
        %1433 = vmatprep.subr.mxu0 0.0
        %1434 = vmatpush2.msra.mxu0 0.0
        %1435 = vmatprep.subr.mxu0 0.0
        %1436 = vmatpush2.msra.mxu0 0.0
        %1437 = vmatprep.subr.mxu0 0.0
        %1438 = vmatpush2.msra.mxu0 0.0
        %1439 = vmatprep.subr.mxu0 0.0
        %1440 = vmatpush2.msra.mxu0 0.0
        %1441 = vmatprep.subr.mxu0 0.0
        %1442 = vmatpush2.msra.mxu0 0.0
        %1443 = vmatprep.subr.mxu0 0.0
        %1444 = vmatpush2.msra.mxu0 0.0
        %1445 = vmatprep.subr.mxu0 0.0
        %1446 = vmatpush2.msra.mxu0 0.0
        %1447 = vmatprep.subr.mxu0 0.0
        %1448 = vmatpush2.msra.mxu0 0.0
        %1449 = vmatprep.subr.mxu0 0.0
        %1450 = vmatpush2.msra.mxu0 0.0
        %1451 = vmatprep.subr.mxu0 0.0
        %1452 = vmatpush2.msra.mxu0 0.0
        %1453 = vmatprep.subr.mxu0 0.0
        %1454 = vmatpush2.msra.mxu0 0.0
        %1455 = vmatprep.subr.mxu0 0.0
        %1456 = vmatpush2.msra.mxu0 0.0
        %1457 = vmatprep.subr.mxu0 0.0
        %1458 = vmatpush2.msra.mxu0 0.0
        %1459 = vmatprep.mubr.f32.mxu0 0.0
        %1460 = vmatmul.mubr.f32.gmra.mxu0 %v1391
        %v1461 = vpop.f32.mrf.mxu0
        %v1462 = vadd.f32 %v212, %v1461
        %v1463 = vpop.f32.mrf.mxu0
        %1464 = vmatprep.mubr.f32.mxu0 0.0
        %1465 = vmatmul.mubr.f32.gmra.mxu0 %v1393
        %v1466 = vpop.f32.mrf.mxu0
        %v1467 = vadd.f32 %v212, %v1466
        %v1468 = vpop.f32.mrf.mxu0
        %1469 = vdwg.mxu0
        %1472 = vrot.lane.b32.xlu0 %v1462, 44
        %v1473 = vpop.permute.xlu0 %1472
        %1474 = vrot.lane.b32.xlu0 %v1467, 44
        %v1475 = vpop.permute.xlu0 %1474
        %vm1478 = vcmask 392544
        %1479 = vst.msk [vmem:[%s201] sm:$0xff] %vm1478, %v1473
        %1480 = vst.msk [vmem:[%s201 + $0x8] sm:$0xff] %vm1478, %v1475
        %1481 = vrot.lane.b32.xlu0 %v1462, 104
        %v1482 = vpop.permute.xlu0 %1481
        %1483 = vrot.lane.b32.xlu0 %v1467, 104
        %v1484 = vpop.permute.xlu0 %1483
        %vm1487 = vcmask 917344
        %1488 = vst.msk [vmem:[%s201] sm:$0xff] %vm1487, %v1482
        %1489 = vst.msk [vmem:[%s201 + $0x8] sm:$0xff] %vm1487, %v1484
        %v1490 = vld [vmem:[%s175] sm:$0xff]
        %v1491 = vld [vmem:[%s175 + $0x8] sm:$0xff]
        %1494 = vrot.lane.b32.xlu0 %v1490, 80
        %v1495 = vpop.permute.xlu0 %1494
        %1496 = vrot.lane.b32.xlu0 %v1491, 80
        %v1497 = vpop.permute.xlu0 %1496
        %v1498 = vsel %vm214, %v1495, 0
        %v1500 = vsel %vm214, %v1497, 0
        %1502 = vmatprep.subr.mxu0 0.0
        %1503 = vmatpush1.msra.mxu0 0.0
        %1504 = vmatprep.subr.mxu0 0.0
        %1505 = vmatpush1.msra.mxu0 0.0
        %1506 = vmatprep.subr.mxu0 0.0
        %1507 = vmatpush1.msra.mxu0 0.0
        %1508 = vmatprep.subr.mxu0 0.0
        %1509 = vmatpush1.msra.mxu0 0.0
        %1510 = vmatprep.subr.mxu0 0.0
        %1511 = vmatpush1.msra.mxu0 0.0
        %1512 = vmatprep.subr.mxu0 0.0
        %1513 = vmatpush1.msra.mxu0 0.0
        %1514 = vmatprep.subr.mxu0 0.0
        %1515 = vmatpush1.msra.mxu0 0.0
        %1516 = vmatprep.subr.mxu0 0.0
        %1517 = vmatpush1.msra.mxu0 0.0
        %1518 = vmatprep.subr.mxu0 0.0
        %1519 = vmatpush1.msra.mxu0 0.0
        %1520 = vmatprep.subr.mxu0 0.0
        %1521 = vmatpush1.msra.mxu0 0.0
        %1522 = vmatprep.subr.mxu0 0.0
        %1523 = vmatpush1.msra.mxu0 0.0
        %1524 = vmatprep.subr.mxu0 0.0
        %1525 = vmatpush1.msra.mxu0 0.0
        %1526 = vmatprep.subr.mxu0 0.0
        %1527 = vmatpush1.msra.mxu0 0.0
        %1528 = vmatprep.subr.mxu0 0.0
        %1529 = vmatpush1.msra.mxu0 0.0
        %1530 = vmatprep.subr.mxu0 0.0
        %1531 = vmatpush1.msra.mxu0 0.0
        %1532 = vmatprep.subr.mxu0 0.0
        %1533 = vmatpush1.msra.mxu0 %v223
        %1534 = vmatprep.subr.mxu0 0.0
        %1535 = vmatpush2.msra.mxu0 0.0
        %1536 = vmatprep.subr.mxu0 0.0
        %1537 = vmatpush2.msra.mxu0 0.0
        %1538 = vmatprep.subr.mxu0 0.0
        %1539 = vmatpush2.msra.mxu0 0.0
        %1540 = vmatprep.subr.mxu0 0.0
        %1541 = vmatpush2.msra.mxu0 0.0
        %1542 = vmatprep.subr.mxu0 0.0
        %1543 = vmatpush2.msra.mxu0 0.0
        %1544 = vmatprep.subr.mxu0 0.0
        %1545 = vmatpush2.msra.mxu0 0.0
        %1546 = vmatprep.subr.mxu0 0.0
        %1547 = vmatpush2.msra.mxu0 0.0
        %1548 = vmatprep.subr.mxu0 0.0
        %1549 = vmatpush2.msra.mxu0 0.0
        %1550 = vmatprep.subr.mxu0 0.0
        %1551 = vmatpush2.msra.mxu0 0.0
        %1552 = vmatprep.subr.mxu0 0.0
        %1553 = vmatpush2.msra.mxu0 0.0
        %1554 = vmatprep.subr.mxu0 0.0
        %1555 = vmatpush2.msra.mxu0 0.0
        %1556 = vmatprep.subr.mxu0 0.0
        %1557 = vmatpush2.msra.mxu0 0.0
        %1558 = vmatprep.subr.mxu0 0.0
        %1559 = vmatpush2.msra.mxu0 0.0
        %1560 = vmatprep.subr.mxu0 0.0
        %1561 = vmatpush2.msra.mxu0 0.0
        %1562 = vmatprep.subr.mxu0 0.0
        %1563 = vmatpush2.msra.mxu0 0.0
        %1564 = vmatprep.subr.mxu0 0.0
        %1565 = vmatpush2.msra.mxu0 0.0
        %1566 = vmatprep.mubr.f32.mxu0 0.0
        %1567 = vmatmul.mubr.f32.gmra.mxu0 %v1498
        %v1568 = vpop.f32.mrf.mxu0
        %v1569 = vadd.f32 %v212, %v1568
        %v1570 = vpop.f32.mrf.mxu0
        %1571 = vmatprep.mubr.f32.mxu0 0.0
        %1572 = vmatmul.mubr.f32.gmra.mxu0 %v1500
        %v1573 = vpop.f32.mrf.mxu0
        %v1574 = vadd.f32 %v212, %v1573
        %v1575 = vpop.f32.mrf.mxu0
        %1576 = vdwg.mxu0
        %1579 = vrot.lane.b32.xlu0 %v1569, 48
        %v1580 = vpop.permute.xlu0 %1579
        %1581 = vrot.lane.b32.xlu0 %v1574, 48
        %v1582 = vpop.permute.xlu0 %1581
        %vm1585 = vcmask 425344
        %1586 = vst.msk [vmem:[%s201] sm:$0xff] %vm1585, %v1580
        %1587 = vst.msk [vmem:[%s201 + $0x8] sm:$0xff] %vm1585, %v1582
        %1588 = vrot.lane.b32.xlu0 %v1569, 108
        %v1589 = vpop.permute.xlu0 %1588
        %1590 = vrot.lane.b32.xlu0 %v1574, 108
        %v1591 = vpop.permute.xlu0 %1590
        %vm1594 = vcmask 950144
        %1595 = vst.msk [vmem:[%s201] sm:$0xff] %vm1594, %v1589
        %1596 = vst.msk [vmem:[%s201 + $0x8] sm:$0xff] %vm1594, %v1591
        %v1597 = vld [vmem:[%s175] sm:$0xff]
        %v1598 = vld [vmem:[%s175 + $0x8] sm:$0xff]
        %1601 = vrot.lane.b32.xlu0 %v1597, 76
        %v1602 = vpop.permute.xlu0 %1601
        %1603 = vrot.lane.b32.xlu0 %v1598, 76
        %v1604 = vpop.permute.xlu0 %1603
        %v1605 = vsel %vm214, %v1602, 0
        %v1607 = vsel %vm214, %v1604, 0
        %1609 = vmatprep.subr.mxu0 0.0
        %1610 = vmatpush1.msra.mxu0 0.0
        %1611 = vmatprep.subr.mxu0 0.0
        %1612 = vmatpush1.msra.mxu0 0.0
        %1613 = vmatprep.subr.mxu0 0.0
        %1614 = vmatpush1.msra.mxu0 0.0
        %1615 = vmatprep.subr.mxu0 0.0
        %1616 = vmatpush1.msra.mxu0 0.0
        %1617 = vmatprep.subr.mxu0 0.0
        %1618 = vmatpush1.msra.mxu0 0.0
        %1619 = vmatprep.subr.mxu0 0.0
        %1620 = vmatpush1.msra.mxu0 0.0
        %1621 = vmatprep.subr.mxu0 0.0
        %1622 = vmatpush1.msra.mxu0 0.0
        %1623 = vmatprep.subr.mxu0 0.0
        %1624 = vmatpush1.msra.mxu0 0.0
        %1625 = vmatprep.subr.mxu0 0.0
        %1626 = vmatpush1.msra.mxu0 0.0
        %1627 = vmatprep.subr.mxu0 0.0
        %1628 = vmatpush1.msra.mxu0 0.0
        %1629 = vmatprep.subr.mxu0 0.0
        %1630 = vmatpush1.msra.mxu0 0.0
        %1631 = vmatprep.subr.mxu0 0.0
        %1632 = vmatpush1.msra.mxu0 0.0
        %1633 = vmatprep.subr.mxu0 0.0
        %1634 = vmatpush1.msra.mxu0 0.0
        %1635 = vmatprep.subr.mxu0 0.0
        %1636 = vmatpush1.msra.mxu0 0.0
        %1637 = vmatprep.subr.mxu0 0.0
        %1638 = vmatpush1.msra.mxu0 0.0
        %1639 = vmatprep.subr.mxu0 0.0
        %1640 = vmatpush1.msra.mxu0 %v223
        %1641 = vmatprep.subr.mxu0 0.0
        %1642 = vmatpush2.msra.mxu0 0.0
        %1643 = vmatprep.subr.mxu0 0.0
        %1644 = vmatpush2.msra.mxu0 0.0
        %1645 = vmatprep.subr.mxu0 0.0
        %1646 = vmatpush2.msra.mxu0 0.0
        %1647 = vmatprep.subr.mxu0 0.0
        %1648 = vmatpush2.msra.mxu0 0.0
        %1649 = vmatprep.subr.mxu0 0.0
        %1650 = vmatpush2.msra.mxu0 0.0
        %1651 = vmatprep.subr.mxu0 0.0
        %1652 = vmatpush2.msra.mxu0 0.0
        %1653 = vmatprep.subr.mxu0 0.0
        %1654 = vmatpush2.msra.mxu0 0.0
        %1655 = vmatprep.subr.mxu0 0.0
        %1656 = vmatpush2.msra.mxu0 0.0
        %1657 = vmatprep.subr.mxu0 0.0
        %1658 = vmatpush2.msra.mxu0 0.0
        %1659 = vmatprep.subr.mxu0 0.0
        %1660 = vmatpush2.msra.mxu0 0.0
        %1661 = vmatprep.subr.mxu0 0.0
        %1662 = vmatpush2.msra.mxu0 0.0
        %1663 = vmatprep.subr.mxu0 0.0
        %1664 = vmatpush2.msra.mxu0 0.0
        %1665 = vmatprep.subr.mxu0 0.0
        %1666 = vmatpush2.msra.mxu0 0.0
        %1667 = vmatprep.subr.mxu0 0.0
        %1668 = vmatpush2.msra.mxu0 0.0
        %1669 = vmatprep.subr.mxu0 0.0
        %1670 = vmatpush2.msra.mxu0 0.0
        %1671 = vmatprep.subr.mxu0 0.0
        %1672 = vmatpush2.msra.mxu0 0.0
        %1673 = vmatprep.mubr.f32.mxu0 0.0
        %1674 = vmatmul.mubr.f32.gmra.mxu0 %v1605
        %v1675 = vpop.f32.mrf.mxu0
        %v1676 = vadd.f32 %v212, %v1675
        %v1677 = vpop.f32.mrf.mxu0
        %1678 = vmatprep.mubr.f32.mxu0 0.0
        %1679 = vmatmul.mubr.f32.gmra.mxu0 %v1607
        %v1680 = vpop.f32.mrf.mxu0
        %v1681 = vadd.f32 %v212, %v1680
        %v1682 = vpop.f32.mrf.mxu0
        %1683 = vdwg.mxu0
        %1686 = vrot.lane.b32.xlu0 %v1676, 52
        %v1687 = vpop.permute.xlu0 %1686
        %1688 = vrot.lane.b32.xlu0 %v1681, 52
        %v1689 = vpop.permute.xlu0 %1688
        %vm1692 = vcmask 458144
        %1693 = vst.msk [vmem:[%s201] sm:$0xff] %vm1692, %v1687
        %1694 = vst.msk [vmem:[%s201 + $0x8] sm:$0xff] %vm1692, %v1689
        %1695 = vrot.lane.b32.xlu0 %v1676, 112
        %v1696 = vpop.permute.xlu0 %1695
        %1697 = vrot.lane.b32.xlu0 %v1681, 112
        %v1698 = vpop.permute.xlu0 %1697
        %vm1701 = vcmask 982944
        %1702 = vst.msk [vmem:[%s201] sm:$0xff] %vm1701, %v1696
        %1703 = vst.msk [vmem:[%s201 + $0x8] sm:$0xff] %vm1701, %v1698
        %v1704 = vld [vmem:[%s175] sm:$0xff]
        %v1705 = vld [vmem:[%s175 + $0x8] sm:$0xff]
        %1708 = vrot.lane.b32.xlu0 %v1704, 72
        %v1709 = vpop.permute.xlu0 %1708
        %1710 = vrot.lane.b32.xlu0 %v1705, 72
        %v1711 = vpop.permute.xlu0 %1710
        %v1712 = vsel %vm214, %v1709, 0
        %v1714 = vsel %vm214, %v1711, 0
        %1716 = vmatprep.subr.mxu0 0.0
        %1717 = vmatpush1.msra.mxu0 0.0
        %1718 = vmatprep.subr.mxu0 0.0
        %1719 = vmatpush1.msra.mxu0 0.0
        %1720 = vmatprep.subr.mxu0 0.0
        %1721 = vmatpush1.msra.mxu0 0.0
        %1722 = vmatprep.subr.mxu0 0.0
        %1723 = vmatpush1.msra.mxu0 0.0
        %1724 = vmatprep.subr.mxu0 0.0
        %1725 = vmatpush1.msra.mxu0 0.0
        %1726 = vmatprep.subr.mxu0 0.0
        %1727 = vmatpush1.msra.mxu0 0.0
        %1728 = vmatprep.subr.mxu0 0.0
        %1729 = vmatpush1.msra.mxu0 0.0
        %1730 = vmatprep.subr.mxu0 0.0
        %1731 = vmatpush1.msra.mxu0 0.0
        %1732 = vmatprep.subr.mxu0 0.0
        %1733 = vmatpush1.msra.mxu0 0.0
        %1734 = vmatprep.subr.mxu0 0.0
        %1735 = vmatpush1.msra.mxu0 0.0
        %1736 = vmatprep.subr.mxu0 0.0
        %1737 = vmatpush1.msra.mxu0 0.0
        %1738 = vmatprep.subr.mxu0 0.0
        %1739 = vmatpush1.msra.mxu0 0.0
        %1740 = vmatprep.subr.mxu0 0.0
        %1741 = vmatpush1.msra.mxu0 0.0
        %1742 = vmatprep.subr.mxu0 0.0
        %1743 = vmatpush1.msra.mxu0 0.0
        %1744 = vmatprep.subr.mxu0 0.0
        %1745 = vmatpush1.msra.mxu0 0.0
        %1746 = vmatprep.subr.mxu0 0.0
        %1747 = vmatpush1.msra.mxu0 %v223
        %1748 = vmatprep.subr.mxu0 0.0
        %1749 = vmatpush2.msra.mxu0 0.0
        %1750 = vmatprep.subr.mxu0 0.0
        %1751 = vmatpush2.msra.mxu0 0.0
        %1752 = vmatprep.subr.mxu0 0.0
        %1753 = vmatpush2.msra.mxu0 0.0
        %1754 = vmatprep.subr.mxu0 0.0
        %1755 = vmatpush2.msra.mxu0 0.0
        %1756 = vmatprep.subr.mxu0 0.0
        %1757 = vmatpush2.msra.mxu0 0.0
        %1758 = vmatprep.subr.mxu0 0.0
        %1759 = vmatpush2.msra.mxu0 0.0
        %1760 = vmatprep.subr.mxu0 0.0
        %1761 = vmatpush2.msra.mxu0 0.0
        %1762 = vmatprep.subr.mxu0 0.0
        %1763 = vmatpush2.msra.mxu0 0.0
        %1764 = vmatprep.subr.mxu0 0.0
        %1765 = vmatpush2.msra.mxu0 0.0
        %1766 = vmatprep.subr.mxu0 0.0
        %1767 = vmatpush2.msra.mxu0 0.0
        %1768 = vmatprep.subr.mxu0 0.0
        %1769 = vmatpush2.msra.mxu0 0.0
        %1770 = vmatprep.subr.mxu0 0.0
        %1771 = vmatpush2.msra.mxu0 0.0
        %1772 = vmatprep.subr.mxu0 0.0
        %1773 = vmatpush2.msra.mxu0 0.0
        %1774 = vmatprep.subr.mxu0 0.0
        %1775 = vmatpush2.msra.mxu0 0.0
        %1776 = vmatprep.subr.mxu0 0.0
        %1777 = vmatpush2.msra.mxu0 0.0
        %1778 = vmatprep.subr.mxu0 0.0
        %1779 = vmatpush2.msra.mxu0 0.0
        %1780 = vmatprep.mubr.f32.mxu0 0.0
        %1781 = vmatmul.mubr.f32.gmra.mxu0 %v1712
        %v1782 = vpop.f32.mrf.mxu0
        %v1783 = vadd.f32 %v212, %v1782
        %v1784 = vpop.f32.mrf.mxu0
        %1785 = vmatprep.mubr.f32.mxu0 0.0
        %1786 = vmatmul.mubr.f32.gmra.mxu0 %v1714
        %v1787 = vpop.f32.mrf.mxu0
        %v1788 = vadd.f32 %v212, %v1787
        %v1789 = vpop.f32.mrf.mxu0
        %1790 = vdwg.mxu0
        %1793 = vrot.lane.b32.xlu0 %v1783, 56
        %v1794 = vpop.permute.xlu0 %1793
        %1795 = vrot.lane.b32.xlu0 %v1788, 56
        %v1796 = vpop.permute.xlu0 %1795
        %vm1799 = vcmask 490944
        %1800 = vst.msk [vmem:[%s201] sm:$0xff] %vm1799, %v1794
        %1801 = vst.msk [vmem:[%s201 + $0x8] sm:$0xff] %vm1799, %v1796
        %1802 = vrot.lane.b32.xlu0 %v1783, 116
        %v1803 = vpop.permute.xlu0 %1802
        %1804 = vrot.lane.b32.xlu0 %v1788, 116
        %v1805 = vpop.permute.xlu0 %1804
        %vm1808 = vcmask 1015744
        %1809 = vst.msk [vmem:[%s201] sm:$0xff] %vm1808, %v1803
        %1810 = vst.msk [vmem:[%s201 + $0x8] sm:$0xff] %vm1808, %v1805
        %v1811 = vld [vmem:[%s175] sm:$0xff]
        %v1812 = vld [vmem:[%s175 + $0x8] sm:$0xff]
        %1815 = vrot.lane.b32.xlu0 %v1811, 68
        %v1816 = vpop.permute.xlu0 %1815
        %1817 = vrot.lane.b32.xlu0 %v1812, 68
        %v1818 = vpop.permute.xlu0 %1817
        %v1819 = vsel %vm214, %v1816, 0
        %v1821 = vsel %vm214, %v1818, 0
        %1823 = vmatprep.subr.mxu0 0.0
        %1824 = vmatpush1.msra.mxu0 0.0
        %1825 = vmatprep.subr.mxu0 0.0
        %1826 = vmatpush1.msra.mxu0 0.0
        %1827 = vmatprep.subr.mxu0 0.0
        %1828 = vmatpush1.msra.mxu0 0.0
        %1829 = vmatprep.subr.mxu0 0.0
        %1830 = vmatpush1.msra.mxu0 0.0
        %1831 = vmatprep.subr.mxu0 0.0
        %1832 = vmatpush1.msra.mxu0 0.0
        %1833 = vmatprep.subr.mxu0 0.0
        %1834 = vmatpush1.msra.mxu0 0.0
        %1835 = vmatprep.subr.mxu0 0.0
        %1836 = vmatpush1.msra.mxu0 0.0
        %1837 = vmatprep.subr.mxu0 0.0
        %1838 = vmatpush1.msra.mxu0 0.0
        %1839 = vmatprep.subr.mxu0 0.0
        %1840 = vmatpush1.msra.mxu0 0.0
        %1841 = vmatprep.subr.mxu0 0.0
        %1842 = vmatpush1.msra.mxu0 0.0
        %1843 = vmatprep.subr.mxu0 0.0
        %1844 = vmatpush1.msra.mxu0 0.0
        %1845 = vmatprep.subr.mxu0 0.0
        %1846 = vmatpush1.msra.mxu0 0.0
        %1847 = vmatprep.subr.mxu0 0.0
        %1848 = vmatpush1.msra.mxu0 0.0
        %1849 = vmatprep.subr.mxu0 0.0
        %1850 = vmatpush1.msra.mxu0 0.0
        %1851 = vmatprep.subr.mxu0 0.0
        %1852 = vmatpush1.msra.mxu0 0.0
        %1853 = vmatprep.subr.mxu0 0.0
        %1854 = vmatpush1.msra.mxu0 %v223
        %1855 = vmatprep.subr.mxu0 0.0
        %1856 = vmatpush2.msra.mxu0 0.0
        %1857 = vmatprep.subr.mxu0 0.0
        %1858 = vmatpush2.msra.mxu0 0.0
        %1859 = vmatprep.subr.mxu0 0.0
        %1860 = vmatpush2.msra.mxu0 0.0
        %1861 = vmatprep.subr.mxu0 0.0
        %1862 = vmatpush2.msra.mxu0 0.0
        %1863 = vmatprep.subr.mxu0 0.0
        %1864 = vmatpush2.msra.mxu0 0.0
        %1865 = vmatprep.subr.mxu0 0.0
        %1866 = vmatpush2.msra.mxu0 0.0
        %1867 = vmatprep.subr.mxu0 0.0
        %1868 = vmatpush2.msra.mxu0 0.0
        %1869 = vmatprep.subr.mxu0 0.0
        %1870 = vmatpush2.msra.mxu0 0.0
        %1871 = vmatprep.subr.mxu0 0.0
        %1872 = vmatpush2.msra.mxu0 0.0
        %1873 = vmatprep.subr.mxu0 0.0
        %1874 = vmatpush2.msra.mxu0 0.0
        %1875 = vmatprep.subr.mxu0 0.0
        %1876 = vmatpush2.msra.mxu0 0.0
        %1877 = vmatprep.subr.mxu0 0.0
        %1878 = vmatpush2.msra.mxu0 0.0
        %1879 = vmatprep.subr.mxu0 0.0
        %1880 = vmatpush2.msra.mxu0 0.0
        %1881 = vmatprep.subr.mxu0 0.0
        %1882 = vmatpush2.msra.mxu0 0.0
        %1883 = vmatprep.subr.mxu0 0.0
        %1884 = vmatpush2.msra.mxu0 0.0
        %1885 = vmatprep.subr.mxu0 0.0
        %1886 = vmatpush2.msra.mxu0 0.0
        %1887 = vmatprep.mubr.f32.mxu0 0.0
        %1888 = vmatmul.mubr.f32.gmra.mxu0 %v1819
        %v1889 = vpop.f32.mrf.mxu0
        %v1890 = vadd.f32 %v212, %v1889
        %v1891 = vpop.f32.mrf.mxu0
        %1892 = vmatprep.mubr.f32.mxu0 0.0
        %1893 = vmatmul.mubr.f32.gmra.mxu0 %v1821
        %v1894 = vpop.f32.mrf.mxu0
        %v1895 = vadd.f32 %v212, %v1894
        %v1896 = vpop.f32.mrf.mxu0
        %1897 = vdwg.mxu0
        %1900 = vrot.lane.b32.xlu0 %v1890, 60
        %v1901 = vpop.permute.xlu0 %1900
        %1902 = vrot.lane.b32.xlu0 %v1895, 60
        %v1903 = vpop.permute.xlu0 %1902
        %vm1906 = vcmask 523744
        %1907 = vst.msk [vmem:[%s201] sm:$0xff] %vm1906, %v1901
        %1908 = vst.msk [vmem:[%s201 + $0x8] sm:$0xff] %vm1906, %v1903
        %1909 = vrot.lane.b32.xlu0 %v1890, 120
        %v1910 = vpop.permute.xlu0 %1909
        %1911 = vrot.lane.b32.xlu0 %v1895, 120
        %v1912 = vpop.permute.xlu0 %1911
        %vm1915 = vcmask 1048544
        %1916 = vst.msk [vmem:[%s201] sm:$0xff] %vm1915, %v1910
        %1917 = vst.msk [vmem:[%s201 + $0x8] sm:$0xff] %vm1915, %v1912
        %s1918 = sand.u32 %s97, 1
        %s1919 = scalar_lea.sflag [#allocation4], %s1918
        %s1920 = sand.u32 %s97, 1
        %s1921 = smul.addr %s1920, 16
        %s1922 = scalar_lea.vmem [#allocation7], %s1921
        // Predicated region
        $region41: #{tpu_custom_call.1} parent=31 // pred_check
          %p1923 = pneg %p107
        $region42: #{tpu_custom_call.1} parent=31 // pred_check_branch
          %1925 = sbr.rel (%p1923) target = $region44
        $region43: #{tpu_custom_call.1} parent=31 // pred_region
          %s1926 = smul.u32 2, %s21
          %s1928 = ssub.s32 256, 256
          %1929 = vsyncadd %s1919, %s1928
          %s1930 = smul.addr %s1926, 128
          %s1931 = scalar_lea.hbm %s3, %s1930
          %s1932 = sshll.u32 %s1922, 4
          %s1933 = int_to_ptr.vmem [resolvable:$true] %s1932
          %1938 = dma.vmem_to_hbm [thread:$0]  %s1933, 256, %s1931, %s1919, 128, 128, 8
        $region44: #{tpu_custom_call.1} parent=31 // pred_fallthru
          _
      $region32: #{tpu_custom_call.1} parent=5 // pred_fallthru
        _
      %p1939 = scmp.le.s32.totalorder 2, %s16
      // Predicated region
      $region45: #{tpu_custom_call.1} parent=5 // pred_check
        %p1940 = pneg %p1939
      $region46: #{tpu_custom_call.1} parent=5 // pred_check_branch
        %1942 = sbr.rel (%p1940) target = $region48
      $region47: #{tpu_custom_call.1} parent=5 // pred_region
        %s1943 = ssub.s32 %s16, 2
        // Predicated region
        $region49: #{tpu_custom_call.1} parent=47 // pred_check
          %p1944 = pneg %p113
        $region50: #{tpu_custom_call.1} parent=47 // pred_check_branch
          %1946 = sbr.rel (%p1944) target = $region52
        $region51: #{tpu_custom_call.1} parent=47 // pred_region
          %s1947 = sand.u32 %s98, 1
          %s1948 = scalar_lea.sflag [#allocation4], %s1947
          %s1949 = sand.u32 %s98, 1
          %s1950 = smul.addr %s1949, 16
          %s1951 = scalar_lea.vmem [#allocation7], %s1950
          %1952 = dma.done %s1948, 256
        $region52: #{tpu_custom_call.1} parent=47 // pred_fallthru
          _
      $region48: #{tpu_custom_call.1} parent=5 // pred_fallthru
        _
    $region6: #{tpu_custom_call.1} parent=1 // loop_footer
      %s20 = sadd.s32 1, %s16
    $region7: #{tpu_custom_call.1} parent=1 // loop_footer_branch
      %15 = sbr.rel target = $region3
    $region8: #{tpu_custom_call.1} parent=1 // loop_exit
      _
    %1953 = vsyncpa [#allocation3], 1
    %s1954 = scalar_lea.sflag [#allocation3], 1
    %1955 = vsyncpa %s1954, 1
    %1956 = vsyncpa [#allocation6], 1
    %1957 = vsyncpa [#allocation4], 1
    %s1958 = scalar_lea.sflag [#allocation4], 1
    %1959 = vsyncpa %s1958, 1

</llo_original>
